<compile_context>
chip_gen: v5e
topology: v5e:2x2
jax: 0.10.0
libtpu: 0.0.40
codegen_flags: <defaults>
</compile_context>

<pallas_src>
import functools

import jax
import jax.numpy as jnp
from jax.experimental import pallas as pl
from jax.experimental.pallas import tpu as pltpu


def _round_up(v, m):
    return ((v + m - 1) // m) * m


# -----------------------------------------------------------------------------
# In-kernel im2col in the flat-spatial layout.
# Borders are handled with a zero halo in the flat dim (VMEM scratch) plus a
# per-tap column mask, instead of jnp.pad in HBM or 9 shifted (H+2,W+2,C)
# sub-tile copies (perf feedback items on padding / slice re-layouts).
# -----------------------------------------------------------------------------
def _im2col_flat(src2d, pad_ref, cols_ref, *, H, W, KH, KW, P):
    # src2d   : (Cin, H*W) f32 value
    # pad_ref : VMEM (Cin, H*W + 2*P) scratch        (P is lane-aligned, >= halo)
    # cols_ref: VMEM (KH*KW*Cin_pad, H*W) scratch    (Cin_pad = Cin rounded to 8)
    HW = H * W
    ph, pw = KH // 2, KW // 2
    cin = src2d.shape[0]
    cin_pad = cols_ref.shape[0] // (KH * KW)

    pad_ref[...] = jnp.zeros_like(pad_ref)
    pad_ref[:, pl.ds(P, HW)] = src2d            # lane-aligned center store
    if cin_pad != cin:
        cols_ref[...] = jnp.zeros_like(cols_ref)  # zero the padded channel rows

    # column index of every flat spatial position (masks row wrap-around)
    col = jax.lax.broadcasted_iota(jnp.int32, (1, HW), 1) % W

    t = 0
    for dy in range(KH):
        for dx in range(KW):
            off = (dy - ph) * W + (dx - pw)
            tap = pad_ref[:, pl.ds(P + off, HW)]          # (Cin, H*W)
            ox = dx - pw
            if ox != 0:
                valid = jnp.logical_and(col + ox >= 0, col + ox < W)
                tap = jnp.where(valid, tap, 0.0)
            cols_ref[pl.ds(t * cin_pad, cin), :] = tap    # 8-aligned sublane offset
            t += 1


# -----------------------------------------------------------------------------
# Fused kernel: shared conv + ReLU + (gamma|beta) conv + InstanceNorm + modulate
# One grid step = one batch element; all intermediates stay in VMEM.
# -----------------------------------------------------------------------------
def _spade_fused_kernel(seg_ref, x_ref, w_sh_ref, b_sh_ref, w_gb_ref, b_gb_ref,
                        o_ref,
                        seg_pad, seg_cols, actv_pad, actv_cols,
                        *, H, W, KH, KW, C, C_pad, P, eps):
    f32 = jnp.float32

    # ---- shared conv + ReLU: actv = relu(W_sh @ im2col(segmap) + b_sh) ----
    seg2d = seg_ref[0].astype(f32)                                   # (label_nc, HW)
    _im2col_flat(seg2d, seg_pad, seg_cols, H=H, W=W, KH=KH, KW=KW, P=P)
    actv = jnp.dot(w_sh_ref[...].astype(f32), seg_cols[...],
                   preferred_element_type=f32) + b_sh_ref[...].astype(f32)
    actv = jnp.maximum(actv, 0.0)                                    # (nf, HW)

    # ---- fused gamma/beta conv: ONE matmul with K = KH*KW*nf, Cout = 2*C_pad ----
    _im2col_flat(actv, actv_pad, actv_cols, H=H, W=W, KH=KH, KW=KW, P=P)
    gb = jnp.dot(w_gb_ref[...].astype(f32), actv_cols[...],
                 preferred_element_type=f32) + b_gb_ref[...].astype(f32)
    gamma = gb[:C, :]                       # rows [0, C)            (8-aligned)
    beta = gb[C_pad:C_pad + C, :]           # rows [C_pad, C_pad+C)  (8-aligned)

    # ---- InstanceNorm2d(affine=False, eps) + SPADE modulation ----
    x2d = x_ref[0].astype(f32)                                       # (C, HW)
    mean = jnp.mean(x2d, axis=1, keepdims=True)
    var = jnp.mean((x2d - mean) ** 2, axis=1, keepdims=True)         # biased variance
    normalized = (x2d - mean) * jax.lax.rsqrt(var + eps)
    o_ref[0] = (normalized * (1.0 + gamma) + beta).astype(o_ref.dtype)


# -----------------------------------------------------------------------------
# Wrapper
# -----------------------------------------------------------------------------
def nearest_resize_nchw(seg, out_h, out_w):
    """PyTorch F.interpolate(mode='nearest'): src = floor(dst * in / out)."""
    _, _, in_h, in_w = seg.shape
    rows = (jnp.arange(out_h) * in_h) // out_h
    cols = (jnp.arange(out_w) * in_w) // out_w
    seg = jnp.take(seg, rows, axis=2)
    seg = jnp.take(seg, cols, axis=3)
    return seg


def _repack_conv_weight(w, cin_pad):
    """(KH, KW, Cin, Cout) -> (Cout, KH*KW*cin_pad), taps major / channels minor."""
    KH, KW, cin, cout = w.shape
    w = jnp.transpose(w, (3, 0, 1, 2))                     # (Cout, KH, KW, Cin)
    if cin_pad != cin:
        w = jnp.pad(w, ((0, 0), (0, 0), (0, 0), (0, cin_pad - cin)))
    return w.reshape(cout, KH * KW * cin_pad)


def spade_forward(params, x_nchw, seg_nchw, *, eps=1e-5):
    """x: (B, norm_nc, H, W); seg: (B, label_nc, Hs, Ws). Returns (B, norm_nc, H, W)."""
    B, C, H, W = x_nchw.shape
    label_nc = seg_nchw.shape[1]
    KH, KW, _, nf = params["w_shared"].shape
    if KH % 2 == 0 or KW % 2 == 0:
        # PyTorch Conv2d with even k and padding=k//2 yields (H+1, W+1) outputs.
        raise ValueError("only odd kernel sizes are supported")

    HW = H * W
    KK = KH * KW
    label_nc_pad = _round_up(label_nc, 8)
    nf_pad = _round_up(nf, 8)
    C_pad = _round_up(C, 8)
    halo = (KH // 2) * W + (KW // 2)
    P = _round_up(halo, 128)                 # lane-aligned halo offset in flat dim
    HWP = HW + 2 * P

    # nearest resize of the segmentation map (index math identical to PyTorch).
    # TODO(synk): arbitrary-ratio nearest resize is a gather along the lane dim;
    # kept as a small XLA gather in the wrapper instead of inside the kernel.
    segmap = nearest_resize_nchw(seg_nchw, H, W)

    # Free, layout-only reshapes: no transposes, no pads -> no extra HBM passes.
    seg_flat = segmap.reshape(B, label_nc, HW)
    x_flat = x_nchw.reshape(B, C, HW)

    # Repack conv weights; concatenate gamma/beta along Cout (rows [0,C) and
    # [C_pad, C_pad+C) so both slices land on 8-aligned sublane offsets).
    w_sh_t = _repack_conv_weight(params["w_shared"], label_nc_pad)   # (nf, KK*label_nc_pad)
    b_sh = params["b_shared"].reshape(nf, 1)
    w_g_t = _repack_conv_weight(params["w_gamma"], nf_pad)           # (C, KK*nf_pad)
    w_b_t = _repack_conv_weight(params["w_beta"], nf_pad)
    w_gb_t = jnp.zeros((2 * C_pad, KK * nf_pad), jnp.float32)
    w_gb_t = w_gb_t.at[:C].set(w_g_t).at[C_pad:C_pad + C].set(w_b_t)
    b_gb = jnp.zeros((2 * C_pad, 1), jnp.float32)
    b_gb = b_gb.at[:C, 0].set(params["b_gamma"]).at[C_pad:C_pad + C, 0].set(params["b_beta"])

    # Explicit VMEM budget from the actual (double-buffered) footprint + headroom.
    fb = 4
    scratch_bytes = fb * (label_nc * HWP + KK * label_nc_pad * HW
                          + nf * HWP + KK * nf_pad * HW)
    block_bytes = fb * (label_nc * HW + 2 * C * HW
                        + nf * KK * label_nc_pad + nf
                        + 2 * C_pad * KK * nf_pad + 2 * C_pad)
    vmem_limit = min(64 * 1024 * 1024,
                     int(1.5 * (2 * block_bytes + scratch_bytes)) + (8 << 20))

    kern = functools.partial(_spade_fused_kernel, H=H, W=W, KH=KH, KW=KW,
                             C=C, C_pad=C_pad, P=P, eps=eps)

    out_flat = pl.pallas_call(
        kern,
        out_shape=jax.ShapeDtypeStruct((B, C, HW), x_nchw.dtype),
        grid=(B,),
        in_specs=[
            pl.BlockSpec((1, label_nc, HW), lambda b: (b, 0, 0)),
            pl.BlockSpec((1, C, HW), lambda b: (b, 0, 0)),
            pl.BlockSpec((nf, KK * label_nc_pad), lambda b: (0, 0)),
            pl.BlockSpec((nf, 1), lambda b: (0, 0)),
            pl.BlockSpec((2 * C_pad, KK * nf_pad), lambda b: (0, 0)),
            pl.BlockSpec((2 * C_pad, 1), lambda b: (0, 0)),
        ],
        out_specs=pl.BlockSpec((1, C, HW), lambda b: (b, 0, 0)),
        scratch_shapes=[
            pltpu.VMEM((label_nc, HWP), jnp.float32),          # seg halo buffer
            pltpu.VMEM((KK * label_nc_pad, HW), jnp.float32),  # seg im2col
            pltpu.VMEM((nf, HWP), jnp.float32),                # actv halo buffer
            pltpu.VMEM((KK * nf_pad, HW), jnp.float32),        # actv im2col (K=288)
        ],
        compiler_params=pltpu.CompilerParams(
            dimension_semantics=("parallel",),
            vmem_limit_bytes=vmem_limit,
        ),
    )(seg_flat, x_flat, w_sh_t, b_sh, w_gb_t, b_gb)
    # TODO(synk): for production resolutions add an H-row grid axis with a KH-1
    # halo so the KK*nf x H*W im2col scratch fits v7x's 64 MiB VMEM and its two
    # TensorCores get a parallel axis beyond batch.

    return out_flat.reshape(B, C, H, W)


# -----------------------------------------------------------------------------
# Params + pure-JAX reference (for validation)
# -----------------------------------------------------------------------------
def init_spade_params(key, *, norm_nc, label_nc, num_filters, kernel_size):
    ks = jax.random.split(key, 6)
    k = kernel_size

    def conv_init(kw, kb, cin, cout):
        fan_in = cin * k * k
        bound = 1.0 / jnp.sqrt(jnp.float32(fan_in))
        w = jax.random.uniform(kw, (k, k, cin, cout), jnp.float32, -bound, bound)
        b = jax.random.uniform(kb, (cout,), jnp.float32, -bound, bound)
        return w, b

    w_sh, b_sh = conv_init(ks[0], ks[1], label_nc, num_filters)
    w_g, b_g = conv_init(ks[2], ks[3], num_filters, norm_nc)
    w_b, b_b = conv_init(ks[4], ks[5], num_filters, norm_nc)
    return dict(w_shared=w_sh, b_shared=b_sh,
                w_gamma=w_g, b_gamma=b_g,
                w_beta=w_b, b_beta=b_b)


def spade_reference(params, x, seg, *, eps=1e-5):
    """Pure-JAX (XLA) reference of the PyTorch SPADE forward."""
    _, _, H, W = x.shape
    mean = jnp.mean(x, axis=(2, 3), keepdims=True)
    var = jnp.mean((x - mean) ** 2, axis=(2, 3), keepdims=True)
    normalized = (x - mean) / jnp.sqrt(var + eps)
    segmap = nearest_resize_nchw(seg, H, W)

    def conv(a, w, b):
        y = jax.lax.conv_general_dilated(
            a, w, window_strides=(1, 1), padding="SAME",
            dimension_numbers=("NCHW", "HWIO", "NCHW"))
        return y + b.reshape(1, -1, 1, 1)

    actv = jax.nn.relu(conv(segmap, params["w_shared"], params["b_shared"]))
    gamma = conv(actv, params["w_gamma"], params["b_gamma"])
    beta = conv(actv, params["w_beta"], params["b_beta"])
    return normalized * (1.0 + gamma) + beta


if __name__ == "__main__":
    # Small, module-consistent shapes.
    B, norm_nc, label_nc = 2, 4, 3
    H = W = 16
    Hs = Ws = 8          # seg at lower resolution -> exercises nearest upsample
    num_filters = 32     # args.spade_filter
    kernel_size = 3      # args.spade_kernel

    key = jax.random.PRNGKey(0)
    k_x, k_seg, k_p = jax.random.split(key, 3)

    x = jax.random.normal(k_x, (B, norm_nc, H, W), jnp.float32)
    seg = jax.random.uniform(k_seg, (B, label_nc, Hs, Ws), jnp.float32)

    params = init_spade_params(k_p, norm_nc=norm_nc, label_nc=label_nc,
                               num_filters=num_filters, kernel_size=kernel_size)

    out = jax.jit(spade_forward)(params, x, seg)
    jax.block_until_ready(out)
    assert out.shape == (B, norm_nc, H, W)

    ref = spade_reference(params, x, seg)
    err = float(jnp.max(jnp.abs(out - ref)))
    assert err < 5e-3, f"mismatch vs reference: max|diff|={err}"

    print("KERNEL_OK")
</pallas_src>

<mosaic_0001>
module attributes {stable_mosaic.version = 11 : i64} {
  func.func @_spade_fused_kernel(%arg0: i32, %arg1: memref<1x3x256xf32, #tpu.memory_space<vmem>>, %arg2: memref<1x4x256xf32, #tpu.memory_space<vmem>>, %arg3: memref<32x72xf32, #tpu.memory_space<vmem>>, %arg4: memref<32x1xf32, #tpu.memory_space<vmem>>, %arg5: memref<16x288xf32, #tpu.memory_space<vmem>>, %arg6: memref<16x1xf32, #tpu.memory_space<vmem>>, %arg7: memref<1x4x256xf32, #tpu.memory_space<vmem>>, %arg8: memref<3x512xf32, #tpu.memory_space<vmem>>, %arg9: memref<72x256xf32, #tpu.memory_space<vmem>>, %arg10: memref<32x512xf32, #tpu.memory_space<vmem>>, %arg11: memref<288x256xf32, #tpu.memory_space<vmem>>) attributes {dimension_semantics = [#tpu.dimension_semantics<parallel>], iteration_bounds = array<i64: 2>, scalar_prefetch = 0 : i64, scratch_operands = 4 : i64, tpu.core_type = #tpu.core_type<tc>, window_params = [{transform_indices = @transform_0, window_bounds = array<i64: 1, 3, 256>}, {transform_indices = @transform_1, window_bounds = array<i64: 1, 4, 256>}, {pipeline_mode = #tpu.pipeline_mode<synchronous>, transform_indices = @transform_2, window_bounds = array<i64: 32, 72>}, {pipeline_mode = #tpu.pipeline_mode<synchronous>, transform_indices = @transform_3, window_bounds = array<i64: 32, 1>}, {pipeline_mode = #tpu.pipeline_mode<synchronous>, transform_indices = @transform_4, window_bounds = array<i64: 16, 288>}, {pipeline_mode = #tpu.pipeline_mode<synchronous>, transform_indices = @transform_5, window_bounds = array<i64: 16, 1>}, {transform_indices = @transform_6, window_bounds = array<i64: 1, 4, 256>}]} {
    %c0 = arith.constant 0 : index
    %c0_0 = arith.constant 0 : index
    %c0_1 = arith.constant 0 : index
    %0 = vector.load %arg1[%c0, %c0_0, %c0_1] : memref<1x3x256xf32, #tpu.memory_space<vmem>>, vector<1x3x256xf32>
    %1 = vector.shape_cast %0 : vector<1x3x256xf32> to vector<3x256xf32>
    %cst = arith.constant 0.000000e+00 : f32
    %2 = vector.broadcast %cst : f32 to vector<3x512xf32>
    %c0_2 = arith.constant 0 : index
    %c0_3 = arith.constant 0 : index
    %3 = vector.load %arg8[%c0_2, %c0_3] : memref<3x512xf32, #tpu.memory_space<vmem>>, vector<3x512xf32>
    tpu.vector_store %arg8[%c0_2, %c0_3], %2 {strides = array<i32>} : memref<3x512xf32, #tpu.memory_space<vmem>>, vector<3x512xf32>,
    %c0_4 = arith.constant 0 : index
    %c128 = arith.constant 128 : index
    %4 = vector.load %arg8[%c0_4, %c128] : memref<3x512xf32, #tpu.memory_space<vmem>>, vector<3x256xf32>
    tpu.vector_store %arg8[%c0_4, %c128], %1 {strides = array<i32>} : memref<3x512xf32, #tpu.memory_space<vmem>>, vector<3x256xf32>,
    %cst_5 = arith.constant 0.000000e+00 : f32
    %5 = vector.broadcast %cst_5 : f32 to vector<72x256xf32>
    %c0_6 = arith.constant 0 : index
    %c0_7 = arith.constant 0 : index
    %6 = vector.load %arg9[%c0_6, %c0_7] : memref<72x256xf32, #tpu.memory_space<vmem>>, vector<72x256xf32>
    tpu.vector_store %arg9[%c0_6, %c0_7], %5 {strides = array<i32>} : memref<72x256xf32, #tpu.memory_space<vmem>>, vector<72x256xf32>,
    %7 = tpu.iota {dimensions = array<i32: 1>} : vector<1x256xi32>
    %c16_i32 = arith.constant 16 : i32
    %c0_i32 = arith.constant 0 : i32
    %8 = arith.cmpi eq, %c16_i32, %c0_i32 : i32
    %c1_i32 = arith.constant 1 : i32
    %9 = arith.select %8, %c1_i32, %c16_i32 : i32
    %10 = vector.broadcast %9 : i32 to vector<1x256xi32>
    %11 = arith.remsi %7, %10 : vector<1x256xi32>
    %c0_i32_8 = arith.constant 0 : i32
    %12 = vector.broadcast %c0_i32_8 : i32 to vector<1x256xi32>
    %13 = arith.cmpi ne, %11, %12 : vector<1x256xi32>
    %c0_i32_9 = arith.constant 0 : i32
    %14 = vector.broadcast %c0_i32_9 : i32 to vector<1x256xi32>
    %15 = arith.cmpi slt, %11, %14 : vector<1x256xi32>
    %c0_i32_10 = arith.constant 0 : i32
    %16 = arith.cmpi slt, %9, %c0_i32_10 : i32
    %17 = vector.broadcast %16 : i1 to vector<1x256xi1>
    %18 = vector.broadcast %17 : vector<1x256xi1> to vector<1x256xi1>
    %19 = arith.xori %15, %18 : vector<1x256xi1>
    %20 = arith.andi %19, %13 : vector<1x256xi1>
    %21 = vector.broadcast %9 : i32 to vector<1x256xi32>
    %22 = arith.addi %11, %21 : vector<1x256xi32>
    %23 = arith.select %20, %22, %11 : vector<1x256xi1>, vector<1x256xi32>
    %c0_11 = arith.constant 0 : index
    %c111 = arith.constant 111 : index
    %24 = vector.load %arg8[%c0_11, %c111] : memref<3x512xf32, #tpu.memory_space<vmem>>, vector<3x256xf32>
    %c-1_i32 = arith.constant -1 : i32
    %25 = vector.broadcast %c-1_i32 : i32 to vector<1x256xi32>
    %26 = arith.addi %23, %25 : vector<1x256xi32>
    %c0_i32_12 = arith.constant 0 : i32
    %27 = vector.broadcast %c0_i32_12 : i32 to vector<1x256xi32>
    %28 = arith.cmpi sge, %26, %27 : vector<1x256xi32>
    %c-1_i32_13 = arith.constant -1 : i32
    %29 = vector.broadcast %c-1_i32_13 : i32 to vector<1x256xi32>
    %30 = arith.addi %23, %29 : vector<1x256xi32>
    %c16_i32_14 = arith.constant 16 : i32
    %31 = vector.broadcast %c16_i32_14 : i32 to vector<1x256xi32>
    %32 = arith.cmpi slt, %30, %31 : vector<1x256xi32>
    %33 = arith.andi %28, %32 : vector<1x256xi1>
    %cst_15 = arith.constant 0.000000e+00 : f32
    %34 = vector.shape_cast %33 : vector<1x256xi1> to vector<1x256xi1>
    %35 = vector.broadcast %34 : vector<1x256xi1> to vector<3x256xi1>
    %36 = vector.broadcast %cst_15 : f32 to vector<3x256xf32>
    %37 = arith.select %35, %24, %36 : vector<3x256xi1>, vector<3x256xf32>
    %c0_16 = arith.constant 0 : index
    %c0_17 = arith.constant 0 : index
    %38 = vector.load %arg9[%c0_16, %c0_17] : memref<72x256xf32, #tpu.memory_space<vmem>>, vector<3x256xf32>
    tpu.vector_store %arg9[%c0_16, %c0_17], %37 {strides = array<i32>} : memref<72x256xf32, #tpu.memory_space<vmem>>, vector<3x256xf32>,
    %c0_18 = arith.constant 0 : index
    %c112 = arith.constant 112 : index
    %39 = vector.load %arg8[%c0_18, %c112] : memref<3x512xf32, #tpu.memory_space<vmem>>, vector<3x256xf32>
    %c8 = arith.constant 8 : index
    %c0_19 = arith.constant 0 : index
    %40 = vector.load %arg9[%c8, %c0_19] : memref<72x256xf32, #tpu.memory_space<vmem>>, vector<3x256xf32>
    tpu.vector_store %arg9[%c8, %c0_19], %39 {strides = array<i32>} : memref<72x256xf32, #tpu.memory_space<vmem>>, vector<3x256xf32>,
    %c0_20 = arith.constant 0 : index
    %c113 = arith.constant 113 : index
    %41 = vector.load %arg8[%c0_20, %c113] : memref<3x512xf32, #tpu.memory_space<vmem>>, vector<3x256xf32>
    %c1_i32_21 = arith.constant 1 : i32
    %42 = vector.broadcast %c1_i32_21 : i32 to vector<1x256xi32>
    %43 = arith.addi %23, %42 : vector<1x256xi32>
    %c0_i32_22 = arith.constant 0 : i32
    %44 = vector.broadcast %c0_i32_22 : i32 to vector<1x256xi32>
    %45 = arith.cmpi sge, %43, %44 : vector<1x256xi32>
    %c1_i32_23 = arith.constant 1 : i32
    %46 = vector.broadcast %c1_i32_23 : i32 to vector<1x256xi32>
    %47 = arith.addi %23, %46 : vector<1x256xi32>
    %c16_i32_24 = arith.constant 16 : i32
    %48 = vector.broadcast %c16_i32_24 : i32 to vector<1x256xi32>
    %49 = arith.cmpi slt, %47, %48 : vector<1x256xi32>
    %50 = arith.andi %45, %49 : vector<1x256xi1>
    %cst_25 = arith.constant 0.000000e+00 : f32
    %51 = vector.shape_cast %50 : vector<1x256xi1> to vector<1x256xi1>
    %52 = vector.broadcast %51 : vector<1x256xi1> to vector<3x256xi1>
    %53 = vector.broadcast %cst_25 : f32 to vector<3x256xf32>
    %54 = arith.select %52, %41, %53 : vector<3x256xi1>, vector<3x256xf32>
    %c16 = arith.constant 16 : index
    %c0_26 = arith.constant 0 : index
    %55 = vector.load %arg9[%c16, %c0_26] : memref<72x256xf32, #tpu.memory_space<vmem>>, vector<3x256xf32>
    tpu.vector_store %arg9[%c16, %c0_26], %54 {strides = array<i32>} : memref<72x256xf32, #tpu.memory_space<vmem>>, vector<3x256xf32>,
    %c0_27 = arith.constant 0 : index
    %c127 = arith.constant 127 : index
    %56 = vector.load %arg8[%c0_27, %c127] : memref<3x512xf32, #tpu.memory_space<vmem>>, vector<3x256xf32>
    %c-1_i32_28 = arith.constant -1 : i32
    %57 = vector.broadcast %c-1_i32_28 : i32 to vector<1x256xi32>
    %58 = arith.addi %23, %57 : vector<1x256xi32>
    %c0_i32_29 = arith.constant 0 : i32
    %59 = vector.broadcast %c0_i32_29 : i32 to vector<1x256xi32>
    %60 = arith.cmpi sge, %58, %59 : vector<1x256xi32>
    %c-1_i32_30 = arith.constant -1 : i32
    %61 = vector.broadcast %c-1_i32_30 : i32 to vector<1x256xi32>
    %62 = arith.addi %23, %61 : vector<1x256xi32>
    %c16_i32_31 = arith.constant 16 : i32
    %63 = vector.broadcast %c16_i32_31 : i32 to vector<1x256xi32>
    %64 = arith.cmpi slt, %62, %63 : vector<1x256xi32>
    %65 = arith.andi %60, %64 : vector<1x256xi1>
    %cst_32 = arith.constant 0.000000e+00 : f32
    %66 = vector.shape_cast %65 : vector<1x256xi1> to vector<1x256xi1>
    %67 = vector.broadcast %66 : vector<1x256xi1> to vector<3x256xi1>
    %68 = vector.broadcast %cst_32 : f32 to vector<3x256xf32>
    %69 = arith.select %67, %56, %68 : vector<3x256xi1>, vector<3x256xf32>
    %c24 = arith.constant 24 : index
    %c0_33 = arith.constant 0 : index
    %70 = vector.load %arg9[%c24, %c0_33] : memref<72x256xf32, #tpu.memory_space<vmem>>, vector<3x256xf32>
    tpu.vector_store %arg9[%c24, %c0_33], %69 {strides = array<i32>} : memref<72x256xf32, #tpu.memory_space<vmem>>, vector<3x256xf32>,
    %c0_34 = arith.constant 0 : index
    %c128_35 = arith.constant 128 : index
    %71 = vector.load %arg8[%c0_34, %c128_35] : memref<3x512xf32, #tpu.memory_space<vmem>>, vector<3x256xf32>
    %c32 = arith.constant 32 : index
    %c0_36 = arith.constant 0 : index
    %72 = vector.load %arg9[%c32, %c0_36] : memref<72x256xf32, #tpu.memory_space<vmem>>, vector<3x256xf32>
    tpu.vector_store %arg9[%c32, %c0_36], %71 {strides = array<i32>} : memref<72x256xf32, #tpu.memory_space<vmem>>, vector<3x256xf32>,
    %c0_37 = arith.constant 0 : index
    %c129 = arith.constant 129 : index
    %73 = vector.load %arg8[%c0_37, %c129] : memref<3x512xf32, #tpu.memory_space<vmem>>, vector<3x256xf32>
    %c1_i32_38 = arith.constant 1 : i32
    %74 = vector.broadcast %c1_i32_38 : i32 to vector<1x256xi32>
    %75 = arith.addi %23, %74 : vector<1x256xi32>
    %c0_i32_39 = arith.constant 0 : i32
    %76 = vector.broadcast %c0_i32_39 : i32 to vector<1x256xi32>
    %77 = arith.cmpi sge, %75, %76 : vector<1x256xi32>
    %c1_i32_40 = arith.constant 1 : i32
    %78 = vector.broadcast %c1_i32_40 : i32 to vector<1x256xi32>
    %79 = arith.addi %23, %78 : vector<1x256xi32>
    %c16_i32_41 = arith.constant 16 : i32
    %80 = vector.broadcast %c16_i32_41 : i32 to vector<1x256xi32>
    %81 = arith.cmpi slt, %79, %80 : vector<1x256xi32>
    %82 = arith.andi %77, %81 : vector<1x256xi1>
    %cst_42 = arith.constant 0.000000e+00 : f32
    %83 = vector.shape_cast %82 : vector<1x256xi1> to vector<1x256xi1>
    %84 = vector.broadcast %83 : vector<1x256xi1> to vector<3x256xi1>
    %85 = vector.broadcast %cst_42 : f32 to vector<3x256xf32>
    %86 = arith.select %84, %73, %85 : vector<3x256xi1>, vector<3x256xf32>
    %c40 = arith.constant 40 : index
    %c0_43 = arith.constant 0 : index
    %87 = vector.load %arg9[%c40, %c0_43] : memref<72x256xf32, #tpu.memory_space<vmem>>, vector<3x256xf32>
    tpu.vector_store %arg9[%c40, %c0_43], %86 {strides = array<i32>} : memref<72x256xf32, #tpu.memory_space<vmem>>, vector<3x256xf32>,
    %c0_44 = arith.constant 0 : index
    %c143 = arith.constant 143 : index
    %88 = vector.load %arg8[%c0_44, %c143] : memref<3x512xf32, #tpu.memory_space<vmem>>, vector<3x256xf32>
    %c-1_i32_45 = arith.constant -1 : i32
    %89 = vector.broadcast %c-1_i32_45 : i32 to vector<1x256xi32>
    %90 = arith.addi %23, %89 : vector<1x256xi32>
    %c0_i32_46 = arith.constant 0 : i32
    %91 = vector.broadcast %c0_i32_46 : i32 to vector<1x256xi32>
    %92 = arith.cmpi sge, %90, %91 : vector<1x256xi32>
    %c-1_i32_47 = arith.constant -1 : i32
    %93 = vector.broadcast %c-1_i32_47 : i32 to vector<1x256xi32>
    %94 = arith.addi %23, %93 : vector<1x256xi32>
    %c16_i32_48 = arith.constant 16 : i32
    %95 = vector.broadcast %c16_i32_48 : i32 to vector<1x256xi32>
    %96 = arith.cmpi slt, %94, %95 : vector<1x256xi32>
    %97 = arith.andi %92, %96 : vector<1x256xi1>
    %cst_49 = arith.constant 0.000000e+00 : f32
    %98 = vector.shape_cast %97 : vector<1x256xi1> to vector<1x256xi1>
    %99 = vector.broadcast %98 : vector<1x256xi1> to vector<3x256xi1>
    %100 = vector.broadcast %cst_49 : f32 to vector<3x256xf32>
    %101 = arith.select %99, %88, %100 : vector<3x256xi1>, vector<3x256xf32>
    %c48 = arith.constant 48 : index
    %c0_50 = arith.constant 0 : index
    %102 = vector.load %arg9[%c48, %c0_50] : memref<72x256xf32, #tpu.memory_space<vmem>>, vector<3x256xf32>
    tpu.vector_store %arg9[%c48, %c0_50], %101 {strides = array<i32>} : memref<72x256xf32, #tpu.memory_space<vmem>>, vector<3x256xf32>,
    %c0_51 = arith.constant 0 : index
    %c144 = arith.constant 144 : index
    %103 = vector.load %arg8[%c0_51, %c144] : memref<3x512xf32, #tpu.memory_space<vmem>>, vector<3x256xf32>
    %c56 = arith.constant 56 : index
    %c0_52 = arith.constant 0 : index
    %104 = vector.load %arg9[%c56, %c0_52] : memref<72x256xf32, #tpu.memory_space<vmem>>, vector<3x256xf32>
    tpu.vector_store %arg9[%c56, %c0_52], %103 {strides = array<i32>} : memref<72x256xf32, #tpu.memory_space<vmem>>, vector<3x256xf32>,
    %c0_53 = arith.constant 0 : index
    %c145 = arith.constant 145 : index
    %105 = vector.load %arg8[%c0_53, %c145] : memref<3x512xf32, #tpu.memory_space<vmem>>, vector<3x256xf32>
    %c1_i32_54 = arith.constant 1 : i32
    %106 = vector.broadcast %c1_i32_54 : i32 to vector<1x256xi32>
    %107 = arith.addi %23, %106 : vector<1x256xi32>
    %c0_i32_55 = arith.constant 0 : i32
    %108 = vector.broadcast %c0_i32_55 : i32 to vector<1x256xi32>
    %109 = arith.cmpi sge, %107, %108 : vector<1x256xi32>
    %c1_i32_56 = arith.constant 1 : i32
    %110 = vector.broadcast %c1_i32_56 : i32 to vector<1x256xi32>
    %111 = arith.addi %23, %110 : vector<1x256xi32>
    %c16_i32_57 = arith.constant 16 : i32
    %112 = vector.broadcast %c16_i32_57 : i32 to vector<1x256xi32>
    %113 = arith.cmpi slt, %111, %112 : vector<1x256xi32>
    %114 = arith.andi %109, %113 : vector<1x256xi1>
    %cst_58 = arith.constant 0.000000e+00 : f32
    %115 = vector.shape_cast %114 : vector<1x256xi1> to vector<1x256xi1>
    %116 = vector.broadcast %115 : vector<1x256xi1> to vector<3x256xi1>
    %117 = vector.broadcast %cst_58 : f32 to vector<3x256xf32>
    %118 = arith.select %116, %105, %117 : vector<3x256xi1>, vector<3x256xf32>
    %c64 = arith.constant 64 : index
    %c0_59 = arith.constant 0 : index
    %119 = vector.load %arg9[%c64, %c0_59] : memref<72x256xf32, #tpu.memory_space<vmem>>, vector<3x256xf32>
    tpu.vector_store %arg9[%c64, %c0_59], %118 {strides = array<i32>} : memref<72x256xf32, #tpu.memory_space<vmem>>, vector<3x256xf32>,
    %c0_60 = arith.constant 0 : index
    %c0_61 = arith.constant 0 : index
    %120 = vector.load %arg3[%c0_60, %c0_61] : memref<32x72xf32, #tpu.memory_space<vmem>>, vector<32x72xf32>
    %c0_62 = arith.constant 0 : index
    %c0_63 = arith.constant 0 : index
    %121 = vector.load %arg9[%c0_62, %c0_63] : memref<72x256xf32, #tpu.memory_space<vmem>>, vector<72x256xf32>
    %cst_64 = arith.constant dense<0.000000e+00> : vector<32x256xf32>
    %122 = tpu.matmul %120, %121, %cst_64 {dimension_numbers = #tpu.dot_dimension_numbers<[1], [0], [0], [1], [0, 0, 1, 1], [], []>} : vector<32x72xf32>, vector<72x256xf32>, vector<32x256xf32> -> vector<32x256xf32>
    %c0_65 = arith.constant 0 : index
    %c0_66 = arith.constant 0 : index
    %123 = vector.load %arg4[%c0_65, %c0_66] : memref<32x1xf32, #tpu.memory_space<vmem>>, vector<32x1xf32>
    %124 = vector.broadcast %123 : vector<32x1xf32> to vector<32x256xf32>
    %125 = arith.addf %122, %124 : vector<32x256xf32>
    %cst_67 = arith.constant 0.000000e+00 : f32
    %126 = vector.broadcast %cst_67 : f32 to vector<32x256xf32>
    %127 = arith.maximumf %125, %126 : vector<32x256xf32>
    %cst_68 = arith.constant 0.000000e+00 : f32
    %128 = vector.broadcast %cst_68 : f32 to vector<32x512xf32>
    %c0_69 = arith.constant 0 : index
    %c0_70 = arith.constant 0 : index
    %129 = vector.load %arg10[%c0_69, %c0_70] : memref<32x512xf32, #tpu.memory_space<vmem>>, vector<32x512xf32>
    tpu.vector_store %arg10[%c0_69, %c0_70], %128 {strides = array<i32>} : memref<32x512xf32, #tpu.memory_space<vmem>>, vector<32x512xf32>,
    %c0_71 = arith.constant 0 : index
    %c128_72 = arith.constant 128 : index
    %130 = vector.load %arg10[%c0_71, %c128_72] : memref<32x512xf32, #tpu.memory_space<vmem>>, vector<32x256xf32>
    tpu.vector_store %arg10[%c0_71, %c128_72], %127 {strides = array<i32>} : memref<32x512xf32, #tpu.memory_space<vmem>>, vector<32x256xf32>,
    %131 = tpu.iota {dimensions = array<i32: 1>} : vector<1x256xi32>
    %c16_i32_73 = arith.constant 16 : i32
    %c0_i32_74 = arith.constant 0 : i32
    %132 = arith.cmpi eq, %c16_i32_73, %c0_i32_74 : i32
    %c1_i32_75 = arith.constant 1 : i32
    %133 = arith.select %132, %c1_i32_75, %c16_i32_73 : i32
    %134 = vector.broadcast %133 : i32 to vector<1x256xi32>
    %135 = arith.remsi %131, %134 : vector<1x256xi32>
    %c0_i32_76 = arith.constant 0 : i32
    %136 = vector.broadcast %c0_i32_76 : i32 to vector<1x256xi32>
    %137 = arith.cmpi ne, %135, %136 : vector<1x256xi32>
    %c0_i32_77 = arith.constant 0 : i32
    %138 = vector.broadcast %c0_i32_77 : i32 to vector<1x256xi32>
    %139 = arith.cmpi slt, %135, %138 : vector<1x256xi32>
    %c0_i32_78 = arith.constant 0 : i32
    %140 = arith.cmpi slt, %133, %c0_i32_78 : i32
    %141 = vector.broadcast %140 : i1 to vector<1x256xi1>
    %142 = vector.broadcast %141 : vector<1x256xi1> to vector<1x256xi1>
    %143 = arith.xori %139, %142 : vector<1x256xi1>
    %144 = arith.andi %143, %137 : vector<1x256xi1>
    %145 = vector.broadcast %133 : i32 to vector<1x256xi32>
    %146 = arith.addi %135, %145 : vector<1x256xi32>
    %147 = arith.select %144, %146, %135 : vector<1x256xi1>, vector<1x256xi32>
    %c0_79 = arith.constant 0 : index
    %c111_80 = arith.constant 111 : index
    %148 = vector.load %arg10[%c0_79, %c111_80] : memref<32x512xf32, #tpu.memory_space<vmem>>, vector<32x256xf32>
    %c-1_i32_81 = arith.constant -1 : i32
    %149 = vector.broadcast %c-1_i32_81 : i32 to vector<1x256xi32>
    %150 = arith.addi %147, %149 : vector<1x256xi32>
    %c0_i32_82 = arith.constant 0 : i32
    %151 = vector.broadcast %c0_i32_82 : i32 to vector<1x256xi32>
    %152 = arith.cmpi sge, %150, %151 : vector<1x256xi32>
    %c-1_i32_83 = arith.constant -1 : i32
    %153 = vector.broadcast %c-1_i32_83 : i32 to vector<1x256xi32>
    %154 = arith.addi %147, %153 : vector<1x256xi32>
    %c16_i32_84 = arith.constant 16 : i32
    %155 = vector.broadcast %c16_i32_84 : i32 to vector<1x256xi32>
    %156 = arith.cmpi slt, %154, %155 : vector<1x256xi32>
    %157 = arith.andi %152, %156 : vector<1x256xi1>
    %cst_85 = arith.constant 0.000000e+00 : f32
    %158 = vector.shape_cast %157 : vector<1x256xi1> to vector<1x256xi1>
    %159 = vector.broadcast %158 : vector<1x256xi1> to vector<32x256xi1>
    %160 = vector.broadcast %cst_85 : f32 to vector<32x256xf32>
    %161 = arith.select %159, %148, %160 : vector<32x256xi1>, vector<32x256xf32>
    %c0_86 = arith.constant 0 : index
    %c0_87 = arith.constant 0 : index
    %162 = vector.load %arg11[%c0_86, %c0_87] : memref<288x256xf32, #tpu.memory_space<vmem>>, vector<32x256xf32>
    tpu.vector_store %arg11[%c0_86, %c0_87], %161 {strides = array<i32>} : memref<288x256xf32, #tpu.memory_space<vmem>>, vector<32x256xf32>,
    %c0_88 = arith.constant 0 : index
    %c112_89 = arith.constant 112 : index
    %163 = vector.load %arg10[%c0_88, %c112_89] : memref<32x512xf32, #tpu.memory_space<vmem>>, vector<32x256xf32>
    %c32_90 = arith.constant 32 : index
    %c0_91 = arith.constant 0 : index
    %164 = vector.load %arg11[%c32_90, %c0_91] : memref<288x256xf32, #tpu.memory_space<vmem>>, vector<32x256xf32>
    tpu.vector_store %arg11[%c32_90, %c0_91], %163 {strides = array<i32>} : memref<288x256xf32, #tpu.memory_space<vmem>>, vector<32x256xf32>,
    %c0_92 = arith.constant 0 : index
    %c113_93 = arith.constant 113 : index
    %165 = vector.load %arg10[%c0_92, %c113_93] : memref<32x512xf32, #tpu.memory_space<vmem>>, vector<32x256xf32>
    %c1_i32_94 = arith.constant 1 : i32
    %166 = vector.broadcast %c1_i32_94 : i32 to vector<1x256xi32>
    %167 = arith.addi %147, %166 : vector<1x256xi32>
    %c0_i32_95 = arith.constant 0 : i32
    %168 = vector.broadcast %c0_i32_95 : i32 to vector<1x256xi32>
    %169 = arith.cmpi sge, %167, %168 : vector<1x256xi32>
    %c1_i32_96 = arith.constant 1 : i32
    %170 = vector.broadcast %c1_i32_96 : i32 to vector<1x256xi32>
    %171 = arith.addi %147, %170 : vector<1x256xi32>
    %c16_i32_97 = arith.constant 16 : i32
    %172 = vector.broadcast %c16_i32_97 : i32 to vector<1x256xi32>
    %173 = arith.cmpi slt, %171, %172 : vector<1x256xi32>
    %174 = arith.andi %169, %173 : vector<1x256xi1>
    %cst_98 = arith.constant 0.000000e+00 : f32
    %175 = vector.shape_cast %174 : vector<1x256xi1> to vector<1x256xi1>
    %176 = vector.broadcast %175 : vector<1x256xi1> to vector<32x256xi1>
    %177 = vector.broadcast %cst_98 : f32 to vector<32x256xf32>
    %178 = arith.select %176, %165, %177 : vector<32x256xi1>, vector<32x256xf32>
    %c64_99 = arith.constant 64 : index
    %c0_100 = arith.constant 0 : index
    %179 = vector.load %arg11[%c64_99, %c0_100] : memref<288x256xf32, #tpu.memory_space<vmem>>, vector<32x256xf32>
    tpu.vector_store %arg11[%c64_99, %c0_100], %178 {strides = array<i32>} : memref<288x256xf32, #tpu.memory_space<vmem>>, vector<32x256xf32>,
    %c0_101 = arith.constant 0 : index
    %c127_102 = arith.constant 127 : index
    %180 = vector.load %arg10[%c0_101, %c127_102] : memref<32x512xf32, #tpu.memory_space<vmem>>, vector<32x256xf32>
    %c-1_i32_103 = arith.constant -1 : i32
    %181 = vector.broadcast %c-1_i32_103 : i32 to vector<1x256xi32>
    %182 = arith.addi %147, %181 : vector<1x256xi32>
    %c0_i32_104 = arith.constant 0 : i32
    %183 = vector.broadcast %c0_i32_104 : i32 to vector<1x256xi32>
    %184 = arith.cmpi sge, %182, %183 : vector<1x256xi32>
    %c-1_i32_105 = arith.constant -1 : i32
    %185 = vector.broadcast %c-1_i32_105 : i32 to vector<1x256xi32>
    %186 = arith.addi %147, %185 : vector<1x256xi32>
    %c16_i32_106 = arith.constant 16 : i32
    %187 = vector.broadcast %c16_i32_106 : i32 to vector<1x256xi32>
    %188 = arith.cmpi slt, %186, %187 : vector<1x256xi32>
    %189 = arith.andi %184, %188 : vector<1x256xi1>
    %cst_107 = arith.constant 0.000000e+00 : f32
    %190 = vector.shape_cast %189 : vector<1x256xi1> to vector<1x256xi1>
    %191 = vector.broadcast %190 : vector<1x256xi1> to vector<32x256xi1>
    %192 = vector.broadcast %cst_107 : f32 to vector<32x256xf32>
    %193 = arith.select %191, %180, %192 : vector<32x256xi1>, vector<32x256xf32>
    %c96 = arith.constant 96 : index
    %c0_108 = arith.constant 0 : index
    %194 = vector.load %arg11[%c96, %c0_108] : memref<288x256xf32, #tpu.memory_space<vmem>>, vector<32x256xf32>
    tpu.vector_store %arg11[%c96, %c0_108], %193 {strides = array<i32>} : memref<288x256xf32, #tpu.memory_space<vmem>>, vector<32x256xf32>,
    %c0_109 = arith.constant 0 : index
    %c128_110 = arith.constant 128 : index
    %195 = vector.load %arg10[%c0_109, %c128_110] : memref<32x512xf32, #tpu.memory_space<vmem>>, vector<32x256xf32>
    %c128_111 = arith.constant 128 : index
    %c0_112 = arith.constant 0 : index
    %196 = vector.load %arg11[%c128_111, %c0_112] : memref<288x256xf32, #tpu.memory_space<vmem>>, vector<32x256xf32>
    tpu.vector_store %arg11[%c128_111, %c0_112], %195 {strides = array<i32>} : memref<288x256xf32, #tpu.memory_space<vmem>>, vector<32x256xf32>,
    %c0_113 = arith.constant 0 : index
    %c129_114 = arith.constant 129 : index
    %197 = vector.load %arg10[%c0_113, %c129_114] : memref<32x512xf32, #tpu.memory_space<vmem>>, vector<32x256xf32>
    %c1_i32_115 = arith.constant 1 : i32
    %198 = vector.broadcast %c1_i32_115 : i32 to vector<1x256xi32>
    %199 = arith.addi %147, %198 : vector<1x256xi32>
    %c0_i32_116 = arith.constant 0 : i32
    %200 = vector.broadcast %c0_i32_116 : i32 to vector<1x256xi32>
    %201 = arith.cmpi sge, %199, %200 : vector<1x256xi32>
    %c1_i32_117 = arith.constant 1 : i32
    %202 = vector.broadcast %c1_i32_117 : i32 to vector<1x256xi32>
    %203 = arith.addi %147, %202 : vector<1x256xi32>
    %c16_i32_118 = arith.constant 16 : i32
    %204 = vector.broadcast %c16_i32_118 : i32 to vector<1x256xi32>
    %205 = arith.cmpi slt, %203, %204 : vector<1x256xi32>
    %206 = arith.andi %201, %205 : vector<1x256xi1>
    %cst_119 = arith.constant 0.000000e+00 : f32
    %207 = vector.shape_cast %206 : vector<1x256xi1> to vector<1x256xi1>
    %208 = vector.broadcast %207 : vector<1x256xi1> to vector<32x256xi1>
    %209 = vector.broadcast %cst_119 : f32 to vector<32x256xf32>
    %210 = arith.select %208, %197, %209 : vector<32x256xi1>, vector<32x256xf32>
    %c160 = arith.constant 160 : index
    %c0_120 = arith.constant 0 : index
    %211 = vector.load %arg11[%c160, %c0_120] : memref<288x256xf32, #tpu.memory_space<vmem>>, vector<32x256xf32>
    tpu.vector_store %arg11[%c160, %c0_120], %210 {strides = array<i32>} : memref<288x256xf32, #tpu.memory_space<vmem>>, vector<32x256xf32>,
    %c0_121 = arith.constant 0 : index
    %c143_122 = arith.constant 143 : index
    %212 = vector.load %arg10[%c0_121, %c143_122] : memref<32x512xf32, #tpu.memory_space<vmem>>, vector<32x256xf32>
    %c-1_i32_123 = arith.constant -1 : i32
    %213 = vector.broadcast %c-1_i32_123 : i32 to vector<1x256xi32>
    %214 = arith.addi %147, %213 : vector<1x256xi32>
    %c0_i32_124 = arith.constant 0 : i32
    %215 = vector.broadcast %c0_i32_124 : i32 to vector<1x256xi32>
    %216 = arith.cmpi sge, %214, %215 : vector<1x256xi32>
    %c-1_i32_125 = arith.constant -1 : i32
    %217 = vector.broadcast %c-1_i32_125 : i32 to vector<1x256xi32>
    %218 = arith.addi %147, %217 : vector<1x256xi32>
    %c16_i32_126 = arith.constant 16 : i32
    %219 = vector.broadcast %c16_i32_126 : i32 to vector<1x256xi32>
    %220 = arith.cmpi slt, %218, %219 : vector<1x256xi32>
    %221 = arith.andi %216, %220 : vector<1x256xi1>
    %cst_127 = arith.constant 0.000000e+00 : f32
    %222 = vector.shape_cast %221 : vector<1x256xi1> to vector<1x256xi1>
    %223 = vector.broadcast %222 : vector<1x256xi1> to vector<32x256xi1>
    %224 = vector.broadcast %cst_127 : f32 to vector<32x256xf32>
    %225 = arith.select %223, %212, %224 : vector<32x256xi1>, vector<32x256xf32>
    %c192 = arith.constant 192 : index
    %c0_128 = arith.constant 0 : index
    %226 = vector.load %arg11[%c192, %c0_128] : memref<288x256xf32, #tpu.memory_space<vmem>>, vector<32x256xf32>
    tpu.vector_store %arg11[%c192, %c0_128], %225 {strides = array<i32>} : memref<288x256xf32, #tpu.memory_space<vmem>>, vector<32x256xf32>,
    %c0_129 = arith.constant 0 : index
    %c144_130 = arith.constant 144 : index
    %227 = vector.load %arg10[%c0_129, %c144_130] : memref<32x512xf32, #tpu.memory_space<vmem>>, vector<32x256xf32>
    %c224 = arith.constant 224 : index
    %c0_131 = arith.constant 0 : index
    %228 = vector.load %arg11[%c224, %c0_131] : memref<288x256xf32, #tpu.memory_space<vmem>>, vector<32x256xf32>
    tpu.vector_store %arg11[%c224, %c0_131], %227 {strides = array<i32>} : memref<288x256xf32, #tpu.memory_space<vmem>>, vector<32x256xf32>,
    %c0_132 = arith.constant 0 : index
    %c145_133 = arith.constant 145 : index
    %229 = vector.load %arg10[%c0_132, %c145_133] : memref<32x512xf32, #tpu.memory_space<vmem>>, vector<32x256xf32>
    %c1_i32_134 = arith.constant 1 : i32
    %230 = vector.broadcast %c1_i32_134 : i32 to vector<1x256xi32>
    %231 = arith.addi %147, %230 : vector<1x256xi32>
    %c0_i32_135 = arith.constant 0 : i32
    %232 = vector.broadcast %c0_i32_135 : i32 to vector<1x256xi32>
    %233 = arith.cmpi sge, %231, %232 : vector<1x256xi32>
    %c1_i32_136 = arith.constant 1 : i32
    %234 = vector.broadcast %c1_i32_136 : i32 to vector<1x256xi32>
    %235 = arith.addi %147, %234 : vector<1x256xi32>
    %c16_i32_137 = arith.constant 16 : i32
    %236 = vector.broadcast %c16_i32_137 : i32 to vector<1x256xi32>
    %237 = arith.cmpi slt, %235, %236 : vector<1x256xi32>
    %238 = arith.andi %233, %237 : vector<1x256xi1>
    %cst_138 = arith.constant 0.000000e+00 : f32
    %239 = vector.shape_cast %238 : vector<1x256xi1> to vector<1x256xi1>
    %240 = vector.broadcast %239 : vector<1x256xi1> to vector<32x256xi1>
    %241 = vector.broadcast %cst_138 : f32 to vector<32x256xf32>
    %242 = arith.select %240, %229, %241 : vector<32x256xi1>, vector<32x256xf32>
    %c256 = arith.constant 256 : index
    %c0_139 = arith.constant 0 : index
    %243 = vector.load %arg11[%c256, %c0_139] : memref<288x256xf32, #tpu.memory_space<vmem>>, vector<32x256xf32>
    tpu.vector_store %arg11[%c256, %c0_139], %242 {strides = array<i32>} : memref<288x256xf32, #tpu.memory_space<vmem>>, vector<32x256xf32>,
    %c0_140 = arith.constant 0 : index
    %c0_141 = arith.constant 0 : index
    %244 = vector.load %arg5[%c0_140, %c0_141] : memref<16x288xf32, #tpu.memory_space<vmem>>, vector<16x288xf32>
    %c0_142 = arith.constant 0 : index
    %c0_143 = arith.constant 0 : index
    %245 = vector.load %arg11[%c0_142, %c0_143] : memref<288x256xf32, #tpu.memory_space<vmem>>, vector<288x256xf32>
    %cst_144 = arith.constant dense<0.000000e+00> : vector<16x256xf32>
    %246 = tpu.matmul %244, %245, %cst_144 {dimension_numbers = #tpu.dot_dimension_numbers<[1], [0], [0], [1], [0, 0, 1, 1], [], []>} : vector<16x288xf32>, vector<288x256xf32>, vector<16x256xf32> -> vector<16x256xf32>
    %c0_145 = arith.constant 0 : index
    %c0_146 = arith.constant 0 : index
    %247 = vector.load %arg6[%c0_145, %c0_146] : memref<16x1xf32, #tpu.memory_space<vmem>>, vector<16x1xf32>
    %248 = vector.broadcast %247 : vector<16x1xf32> to vector<16x256xf32>
    %249 = arith.addf %246, %248 : vector<16x256xf32>
    %250 = vector.extract_strided_slice %249 {offsets = [0, 0], sizes = [4, 256], strides = [1, 1]} : vector<16x256xf32> to vector<4x256xf32>
    %251 = vector.extract_strided_slice %249 {offsets = [8, 0], sizes = [4, 256], strides = [1, 1]} : vector<16x256xf32> to vector<4x256xf32>
    %c0_147 = arith.constant 0 : index
    %c0_148 = arith.constant 0 : index
    %c0_149 = arith.constant 0 : index
    %252 = vector.load %arg2[%c0_147, %c0_148, %c0_149] : memref<1x4x256xf32, #tpu.memory_space<vmem>>, vector<1x4x256xf32>
    %253 = vector.shape_cast %252 : vector<1x4x256xf32> to vector<4x256xf32>
    %cst_150 = arith.constant dense<0.000000e+00> : vector<4xf32>
    %254 = vector.multi_reduction <add>, %253, %cst_150 [1] : vector<4x256xf32> to vector<4xf32>
    %255 = vector.shape_cast %254 : vector<4xf32> to vector<4x1xf32>
    %cst_151 = arith.constant 2.560000e+02 : f32
    %256 = vector.broadcast %cst_151 : f32 to vector<4x1xf32>
    %257 = arith.divf %255, %256 : vector<4x1xf32>
    %258 = vector.broadcast %257 : vector<4x1xf32> to vector<4x256xf32>
    %259 = arith.subf %253, %258 : vector<4x256xf32>
    %260 = arith.mulf %259, %259 : vector<4x256xf32>
    %cst_152 = arith.constant dense<0.000000e+00> : vector<4xf32>
    %261 = vector.multi_reduction <add>, %260, %cst_152 [1] : vector<4x256xf32> to vector<4xf32>
    %262 = vector.shape_cast %261 : vector<4xf32> to vector<4x1xf32>
    %cst_153 = arith.constant 2.560000e+02 : f32
    %263 = vector.broadcast %cst_153 : f32 to vector<4x1xf32>
    %264 = arith.divf %262, %263 : vector<4x1xf32>
    %265 = vector.broadcast %257 : vector<4x1xf32> to vector<4x256xf32>
    %266 = arith.subf %253, %265 : vector<4x256xf32>
    %cst_154 = arith.constant 9.99999974E-6 : f32
    %267 = vector.broadcast %cst_154 : f32 to vector<4x1xf32>
    %268 = arith.addf %264, %267 : vector<4x1xf32>
    %269 = math.rsqrt %268 : vector<4x1xf32>
    %270 = vector.broadcast %269 : vector<4x1xf32> to vector<4x256xf32>
    %271 = arith.mulf %266, %270 : vector<4x256xf32>
    %cst_155 = arith.constant 1.000000e+00 : f32
    %272 = vector.broadcast %cst_155 : f32 to vector<4x256xf32>
    %273 = arith.addf %272, %250 : vector<4x256xf32>
    %274 = arith.mulf %271, %273 : vector<4x256xf32>
    %275 = arith.addf %274, %251 : vector<4x256xf32>
    %c0_156 = arith.constant 0 : index
    %c0_157 = arith.constant 0 : index
    %c0_158 = arith.constant 0 : index
    %276 = vector.load %arg7[%c0_156, %c0_157, %c0_158] : memref<1x4x256xf32, #tpu.memory_space<vmem>>, vector<1x4x256xf32>
    %277 = vector.shape_cast %276 : vector<1x4x256xf32> to vector<4x256xf32>
    %278 = vector.shape_cast %275 : vector<4x256xf32> to vector<1x4x256xf32>
    tpu.vector_store %arg7[%c0_156, %c0_157, %c0_158], %278 {strides = array<i32>} : memref<1x4x256xf32, #tpu.memory_space<vmem>>, vector<1x4x256xf32>,
    return
  }
  func.func @transform_0(%arg0: i32) -> (i32, i32, i32) {
    %c0_i32 = arith.constant 0 : i32
    %c0_i32_0 = arith.constant 0 : i32
    %c0_i32_1 = arith.constant 0 : i32
    return %arg0, %c0_i32, %c0_i32_0 : i32, i32, i32
  }
  func.func @transform_1(%arg0: i32) -> (i32, i32, i32) {
    %c0_i32 = arith.constant 0 : i32
    %c0_i32_0 = arith.constant 0 : i32
    %c0_i32_1 = arith.constant 0 : i32
    return %arg0, %c0_i32, %c0_i32_0 : i32, i32, i32
  }
  func.func @transform_2(%arg0: i32) -> (i32, i32) {
    %c0_i32 = arith.constant 0 : i32
    %c0_i32_0 = arith.constant 0 : i32
    %c0_i32_1 = arith.constant 0 : i32
    return %c0_i32, %c0_i32_0 : i32, i32
  }
  func.func @transform_3(%arg0: i32) -> (i32, i32) {
    %c0_i32 = arith.constant 0 : i32
    %c0_i32_0 = arith.constant 0 : i32
    %c0_i32_1 = arith.constant 0 : i32
    return %c0_i32, %c0_i32_0 : i32, i32
  }
  func.func @transform_4(%arg0: i32) -> (i32, i32) {
    %c0_i32 = arith.constant 0 : i32
    %c0_i32_0 = arith.constant 0 : i32
    %c0_i32_1 = arith.constant 0 : i32
    return %c0_i32, %c0_i32_0 : i32, i32
  }
  func.func @transform_5(%arg0: i32) -> (i32, i32) {
    %c0_i32 = arith.constant 0 : i32
    %c0_i32_0 = arith.constant 0 : i32
    %c0_i32_1 = arith.constant 0 : i32
    return %c0_i32, %c0_i32_0 : i32, i32
  }
  func.func @transform_6(%arg0: i32) -> (i32, i32, i32) {
    %c0_i32 = arith.constant 0 : i32
    %c0_i32_0 = arith.constant 0 : i32
    %c0_i32_1 = arith.constant 0 : i32
    return %arg0, %c0_i32, %c0_i32_0 : i32, i32, i32
  }
}

</mosaic_0001>

<llo_original>
// kernel: spade_forward.1
$region0: #{spade_forward.1}
  #allocation0 [shape = 'u32[]', space=smem, size = 0x4, offset = 0x4, fixed_abs, tag = 'smem constant byte address 0x4 - core index']
  #allocation1 [shape = 'u32[72,128]{1,0:T(1,128)}', space=vmem, size = 0x9000, scoped, tag = 'internal scratch']
  #allocation2 [shape = 'f32[3,512]{1,0:T(4,128)}', space=vmem, size = 0x2000, scoped, tag = 'scratch operand']
  #allocation3 [shape = 'f32[72,256]{1,0:T(8,128)}', space=vmem, size = 0x12000, scoped, tag = 'scratch operand']
  #allocation4 [shape = 'f32[32,512]{1,0:T(8,128)}', space=vmem, size = 0x10000, scoped, tag = 'scratch operand']
  #allocation5 [shape = 'f32[288,256]{1,0:T(8,128)}', space=vmem, size = 0x48000, scoped, tag = 'scratch operand']
  %s0 = inlined_call_operand.vmem [shape: f32[2,3,256], index: 0, kind: input, shape index: {}]
  %s1 = inlined_call_operand.vmem [shape: f32[2,4,256], index: 1, kind: input, shape index: {}]
  %s2 = inlined_call_operand.vmem [shape: f32[32,72], index: 2, kind: input, shape index: {}]
  %s3 = inlined_call_operand.vmem [shape: f32[32,1], index: 3, kind: input, shape index: {}]
  %s4 = inlined_call_operand.vmem [shape: f32[16,288], index: 4, kind: input, shape index: {}]
  %s5 = inlined_call_operand.vmem [shape: f32[16,1], index: 5, kind: input, shape index: {}]
  %s6 = inlined_call_operand.vmem [shape: f32[2,4,256], index: 6, kind: output, shape index: {}]
  %s7 = sld [smem:[#allocation0]]
  $region57: #{spade_forward.1} parent=0
    _
  %s9 = ssub.s32 1, %s7
  %s10 = scalar_select 0, %s9, %s7
  loop: start=0, step=1, limit=4
  $region2: #{spade_forward.1} parent=0 // loop_pre_header
    _
  $region3: #{spade_forward.1} parent=0 // loop_header
    %s12 = sphi 0, %s16
    %p13 = scmp.ge.s32.totalorder %s12, 4
    %s22 = sphi 0, %s24
    %s25 = sphi 0, %s22
    %s26 = sphi 0, %s25
    %s42 = sphi 0, %s26
    %s48 = sphi 0, %s50
    %s51 = sphi 0, %s48
    %s52 = sphi 0, %s51
    %s68 = sphi 0, %s52
    %s72 = sphi 0, %s72
    %s74 = sphi 0, %s72
    %s75 = sphi 0, %s74
    %s89 = sphi 0, %s75
    %s93 = sphi 0, %s93
    %s95 = sphi 0, %s93
    %s96 = sphi 0, %s95
    %s110 = sphi 0, %s96
    %s114 = sphi 0, %s114
    %s116 = sphi 0, %s114
    %s117 = sphi 0, %s116
    %s131 = sphi 0, %s117
    %s135 = sphi 0, %s135
    %s137 = sphi 0, %s135
    %s138 = sphi 0, %s137
    %s152 = sphi 0, %s138
    %s158 = sphi 0, %s160
    %s161 = sphi 0, %s158
    %s162 = sphi 0, %s161
    %s178 = sphi 0, %s162
  $region4: #{spade_forward.1} parent=0 // loop_header_branch
    %15 = sbr.rel (%p13) target = $region8
  $region5: #{spade_forward.1} parent=0 // loop_body
    %s17 = ssub.s32 %s12, 1
    %s18 = ssub.s32 %s12, 2
    %s19 = sadd.s32 %s12, 1
    %s20 = ssub.s32 %s12, %s19
    %p21 = scmp.eq.s32.totalorder %s20, 0
    %s23 = sadd.s32 %s22, 1
    %s24 = scalar_select %p21, %s22, %s23
    %p27 = pneg %p21
    %p28 = scmp.eq.s32.totalorder %s12, 1
    %p29 = por %p27, %p28
    %p30 = scmp.ne.s32.totalorder %s22, %s25
    %p31 = scmp.eq.s32.totalorder %s12, 0
    %p32 = por %p30, %p31
    %p33 = scmp.ne.s32.totalorder %s22, %s25
    %p34 = scmp.eq.s32.totalorder %s17, 1
    %p35 = por %p33, %p34
    %p36 = scmp.ne.s32.totalorder %s25, %s26
    %p37 = scmp.eq.s32.totalorder %s17, 0
    %p38 = por %p36, %p37
    %p39 = scmp.ne.s32.totalorder %s25, %s26
    %p40 = scmp.eq.s32.totalorder %s18, 1
    %p41 = por %p39, %p40
    %p43 = scmp.ne.s32.totalorder %s26, %s42
    %p44 = scmp.eq.s32.totalorder %s18, 0
    %p45 = por %p43, %p44
    %s46 = ssub.s32 %s12, %s19
    %p47 = scmp.eq.s32.totalorder %s46, 0
    %s49 = sadd.s32 %s48, 1
    %s50 = scalar_select %p47, %s48, %s49
    %p53 = pneg %p47
    %p54 = scmp.eq.s32.totalorder %s12, 1
    %p55 = por %p53, %p54
    %p56 = scmp.ne.s32.totalorder %s48, %s51
    %p57 = scmp.eq.s32.totalorder %s12, 0
    %p58 = por %p56, %p57
    %p59 = scmp.ne.s32.totalorder %s48, %s51
    %p60 = scmp.eq.s32.totalorder %s17, 1
    %p61 = por %p59, %p60
    %p62 = scmp.ne.s32.totalorder %s51, %s52
    %p63 = scmp.eq.s32.totalorder %s17, 0
    %p64 = por %p62, %p63
    %p65 = scmp.ne.s32.totalorder %s51, %s52
    %p66 = scmp.eq.s32.totalorder %s18, 1
    %p67 = por %p65, %p66
    %p69 = scmp.ne.s32.totalorder %s52, %s68
    %p70 = scmp.eq.s32.totalorder %s18, 0
    %p71 = por %p69, %p70
    %s73 = sadd.s32 %s72, 1
    %p76 = scmp.eq.s32.totalorder %s12, 1
    %p77 = scmp.ne.s32.totalorder %s72, %s74
    %p78 = scmp.eq.s32.totalorder %s12, 0
    %p79 = por %p77, %p78
    %p80 = scmp.ne.s32.totalorder %s72, %s74
    %p81 = scmp.eq.s32.totalorder %s17, 1
    %p82 = por %p80, %p81
    %p83 = scmp.ne.s32.totalorder %s74, %s75
    %p84 = scmp.eq.s32.totalorder %s17, 0
    %p85 = por %p83, %p84
    %p86 = scmp.ne.s32.totalorder %s74, %s75
    %p87 = scmp.eq.s32.totalorder %s18, 1
    %p88 = por %p86, %p87
    %p90 = scmp.ne.s32.totalorder %s75, %s89
    %p91 = scmp.eq.s32.totalorder %s18, 0
    %p92 = por %p90, %p91
    %s94 = sadd.s32 %s93, 1
    %p97 = scmp.eq.s32.totalorder %s12, 1
    %p98 = scmp.ne.s32.totalorder %s93, %s95
    %p99 = scmp.eq.s32.totalorder %s12, 0
    %p100 = por %p98, %p99
    %p101 = scmp.ne.s32.totalorder %s93, %s95
    %p102 = scmp.eq.s32.totalorder %s17, 1
    %p103 = por %p101, %p102
    %p104 = scmp.ne.s32.totalorder %s95, %s96
    %p105 = scmp.eq.s32.totalorder %s17, 0
    %p106 = por %p104, %p105
    %p107 = scmp.ne.s32.totalorder %s95, %s96
    %p108 = scmp.eq.s32.totalorder %s18, 1
    %p109 = por %p107, %p108
    %p111 = scmp.ne.s32.totalorder %s96, %s110
    %p112 = scmp.eq.s32.totalorder %s18, 0
    %p113 = por %p111, %p112
    %s115 = sadd.s32 %s114, 1
    %p118 = scmp.eq.s32.totalorder %s12, 1
    %p119 = scmp.ne.s32.totalorder %s114, %s116
    %p120 = scmp.eq.s32.totalorder %s12, 0
    %p121 = por %p119, %p120
    %p122 = scmp.ne.s32.totalorder %s114, %s116
    %p123 = scmp.eq.s32.totalorder %s17, 1
    %p124 = por %p122, %p123
    %p125 = scmp.ne.s32.totalorder %s116, %s117
    %p126 = scmp.eq.s32.totalorder %s17, 0
    %p127 = por %p125, %p126
    %p128 = scmp.ne.s32.totalorder %s116, %s117
    %p129 = scmp.eq.s32.totalorder %s18, 1
    %p130 = por %p128, %p129
    %p132 = scmp.ne.s32.totalorder %s117, %s131
    %p133 = scmp.eq.s32.totalorder %s18, 0
    %p134 = por %p132, %p133
    %s136 = sadd.s32 %s135, 1
    %p139 = scmp.eq.s32.totalorder %s12, 1
    %p140 = scmp.ne.s32.totalorder %s135, %s137
    %p141 = scmp.eq.s32.totalorder %s12, 0
    %p142 = por %p140, %p141
    %p143 = scmp.ne.s32.totalorder %s135, %s137
    %p144 = scmp.eq.s32.totalorder %s17, 1
    %p145 = por %p143, %p144
    %p146 = scmp.ne.s32.totalorder %s137, %s138
    %p147 = scmp.eq.s32.totalorder %s17, 0
    %p148 = por %p146, %p147
    %p149 = scmp.ne.s32.totalorder %s137, %s138
    %p150 = scmp.eq.s32.totalorder %s18, 1
    %p151 = por %p149, %p150
    %p153 = scmp.ne.s32.totalorder %s138, %s152
    %p154 = scmp.eq.s32.totalorder %s18, 0
    %p155 = por %p153, %p154
    %s156 = ssub.s32 %s12, %s19
    %p157 = scmp.eq.s32.totalorder %s156, 0
    %s159 = sadd.s32 %s158, 1
    %s160 = scalar_select %p157, %s158, %s159
    %p163 = pneg %p157
    %p164 = scmp.eq.s32.totalorder %s12, 1
    %p165 = por %p163, %p164
    %p166 = scmp.ne.s32.totalorder %s158, %s161
    %p167 = scmp.eq.s32.totalorder %s12, 0
    %p168 = por %p166, %p167
    %p169 = scmp.ne.s32.totalorder %s158, %s161
    %p170 = scmp.eq.s32.totalorder %s17, 1
    %p171 = por %p169, %p170
    %p172 = scmp.ne.s32.totalorder %s161, %s162
    %p173 = scmp.eq.s32.totalorder %s17, 0
    %p174 = por %p172, %p173
    %p175 = scmp.ne.s32.totalorder %s161, %s162
    %p176 = scmp.eq.s32.totalorder %s18, 1
    %p177 = por %p175, %p176
    %p179 = scmp.ne.s32.totalorder %s162, %s178
    %p180 = scmp.eq.s32.totalorder %s18, 0
    %p181 = por %p179, %p180
    %p182 = scmp.le.s32.totalorder 1, %s12
    %p183 = scmp.lt.s32.totalorder %s12, 3
    %p184 = pnand %p182, %p183
    %p185 = pneg %p184
    // Predicated region
    $region9: #{spade_forward.1} parent=5 // pred_check
      _
    $region10: #{spade_forward.1} parent=5 // pred_check_branch
      %187 = sbr.rel (%p184) target = $region12
    $region11: #{spade_forward.1} parent=5 // pred_region
      %s188 = ssub.s32 %s12, 1
      // Predicated region
      $region13: #{spade_forward.1} parent=11 // pred_check
        %p189 = pneg %p85
      $region14: #{spade_forward.1} parent=11 // pred_check_branch
        %191 = sbr.rel (%p189) target = $region16
      $region15: #{spade_forward.1} parent=11 // pred_region
        _
      $region16: #{spade_forward.1} parent=11 // pred_fallthru
        _
      // Predicated region
      $region17: #{spade_forward.1} parent=11 // pred_check
        %p192 = pneg %p106
      $region18: #{spade_forward.1} parent=11 // pred_check_branch
        %194 = sbr.rel (%p192) target = $region20
      $region19: #{spade_forward.1} parent=11 // pred_region
        _
      $region20: #{spade_forward.1} parent=11 // pred_fallthru
        _
      // Predicated region
      $region21: #{spade_forward.1} parent=11 // pred_check
        %p195 = pneg %p127
      $region22: #{spade_forward.1} parent=11 // pred_check_branch
        %197 = sbr.rel (%p195) target = $region24
      $region23: #{spade_forward.1} parent=11 // pred_region
        _
      $region24: #{spade_forward.1} parent=11 // pred_fallthru
        _
      // Predicated region
      $region25: #{spade_forward.1} parent=11 // pred_check
        %p198 = pneg %p148
      $region26: #{spade_forward.1} parent=11 // pred_check_branch
        %200 = sbr.rel (%p198) target = $region28
      $region27: #{spade_forward.1} parent=11 // pred_region
        _
      $region28: #{spade_forward.1} parent=11 // pred_fallthru
        _
    $region12: #{spade_forward.1} parent=5 // pred_fallthru
      _
    %p201 = scmp.lt.s32.totalorder %s12, 2
    // Predicated region
    $region29: #{spade_forward.1} parent=5 // pred_check
      %p202 = pneg %p201
    $region30: #{spade_forward.1} parent=5 // pred_check_branch
      %204 = sbr.rel (%p202) target = $region32
    $region31: #{spade_forward.1} parent=5 // pred_region
      // Predicated region
      $region33: #{spade_forward.1} parent=31 // pred_check
        %p205 = pneg %p32
      $region34: #{spade_forward.1} parent=31 // pred_check_branch
        %207 = sbr.rel (%p205) target = $region36
      $region35: #{spade_forward.1} parent=31 // pred_region
        %p208 = scmp.lt.s32.totalorder %s12, 1
        %s209 = scalar_select %p208, %s12, 1
        %s210 = smul.addr %s209, 2
        %s211 = smul.addr %s210, 4
        %s212 = scalar_lea.vmem %s0, %s211
      $region36: #{spade_forward.1} parent=31 // pred_fallthru
        _
      // Predicated region
      $region37: #{spade_forward.1} parent=31 // pred_check
        %p213 = pneg %p58
      $region38: #{spade_forward.1} parent=31 // pred_check_branch
        %215 = sbr.rel (%p213) target = $region40
      $region39: #{spade_forward.1} parent=31 // pred_region
        %p216 = scmp.lt.s32.totalorder %s12, 1
        %s217 = scalar_select %p216, %s12, 1
        %s218 = smul.addr %s217, 2
        %s219 = smul.addr %s218, 4
        %s220 = scalar_lea.vmem %s1, %s219
      $region40: #{spade_forward.1} parent=31 // pred_fallthru
        _
    $region32: #{spade_forward.1} parent=5 // pred_fallthru
      _
    %p221 = scmp.le.s32.totalorder 1, %s12
    %p222 = scmp.lt.s32.totalorder %s12, 3
    %p223 = pnand %p221, %p222
    %p224 = pneg %p223
    // Predicated region
    $region41: #{spade_forward.1} parent=5 // pred_check
      _
    $region42: #{spade_forward.1} parent=5 // pred_check_branch
      %226 = sbr.rel (%p223) target = $region44
    $region43: #{spade_forward.1} parent=5 // pred_region
      %s227 = ssub.s32 %s12, 1
      %p228 = scmp.lt.s32.totalorder %s17, 1
      %s229 = scalar_select %p228, %s17, 1
      %s230 = smul.addr %s229, 2
      %s231 = smul.addr %s230, 4
      %s232 = scalar_lea.vmem %s0, %s231
      %p233 = pneg %p38
      %p234 = pneg %p35
      %p235 = scmp.lt.s32.totalorder %s17, 1
      %s236 = scalar_select %p235, %s17, 1
      %s237 = smul.addr %s236, 2
      %s238 = smul.addr %s237, 4
      %s239 = scalar_lea.vmem %s1, %s238
      %p240 = pneg %p64
      %p241 = pneg %p61
      %p242 = pneg %p85
      %p243 = pneg %p82
      %p244 = pneg %p106
      %p245 = pneg %p103
      %p246 = pneg %p127
      %p247 = pneg %p124
      %p248 = pneg %p148
      %p249 = pneg %p145
      %p250 = pneg %p174
      %p251 = pneg %p171
      %p252 = scmp.lt.s32.totalorder %s17, 1
      %s253 = scalar_select %p252, %s17, 1
      %s254 = smul.addr %s253, 2
      %s255 = smul.addr %s254, 4
      %s256 = scalar_lea.vmem %s6, %s255
      %p257 = scmp.lt.s32.totalorder %s17, 1
      %s258 = scalar_select %p257, %s17, 1
      %s259 = smul.addr %s258, 2
      %s260 = smul.addr %s259, 4
      %s261 = scalar_lea.vmem %s0, %s260
      %p262 = scmp.lt.s32.totalorder %s17, 1
      %s263 = scalar_select %p262, %s17, 1
      %s264 = smul.addr %s263, 2
      %s265 = smul.addr %s264, 4
      %s266 = scalar_lea.vmem %s1, %s265
      %p267 = scmp.lt.s32.totalorder %s17, 1
      %s268 = scalar_select %p267, %s17, 1
      %s269 = smul.addr %s268, 2
      %s270 = smul.addr %s269, 4
      %s271 = scalar_lea.vmem %s6, %s270
      %v272 = vld [vmem:[%s261] sm:$0x77]
      %273 = vst [vmem:[#allocation2] sm:$0x77] 0.0
      %274 = vst [vmem:[#allocation2 + $0x8] sm:$0x77] 0.0
      %275 = vst [vmem:[#allocation2 + $0x4] sm:$0x77] %v272
      %276 = vst [vmem:[#allocation3] sm:$0xff] 0.0
      %277 = vst [vmem:[#allocation3 + $0x8] sm:$0xff] 0.0
      %278 = vst [vmem:[#allocation3 + $0x10] sm:$0xff] 0.0
      %279 = vst [vmem:[#allocation3 + $0x18] sm:$0xff] 0.0
      %280 = vst [vmem:[#allocation3 + $0x20] sm:$0xff] 0.0
      %281 = vst [vmem:[#allocation3 + $0x28] sm:$0xff] 0.0
      %282 = vst [vmem:[#allocation3 + $0x30] sm:$0xff] 0.0
      %283 = vst [vmem:[#allocation3 + $0x38] sm:$0xff] 0.0
      %284 = vst [vmem:[#allocation3 + $0x40] sm:$0xff] 0.0
      %285 = vst [vmem:[#allocation3 + $0x48] sm:$0xff] 0.0
      %286 = vst [vmem:[#allocation3 + $0x50] sm:$0xff] 0.0
      %287 = vst [vmem:[#allocation3 + $0x58] sm:$0xff] 0.0
      %288 = vst [vmem:[#allocation3 + $0x60] sm:$0xff] 0.0
      %289 = vst [vmem:[#allocation3 + $0x68] sm:$0xff] 0.0
      %290 = vst [vmem:[#allocation3 + $0x70] sm:$0xff] 0.0
      %291 = vst [vmem:[#allocation3 + $0x78] sm:$0xff] 0.0
      %292 = vst [vmem:[#allocation3 + $0x80] sm:$0xff] 0.0
      %293 = vst [vmem:[#allocation3 + $0x88] sm:$0xff] 0.0
      %v294 = vlaneseq
      %v295 = vand.u32 %v294, 127
      %v296 = vadd.s32 %v295, 128
      %vm297 = vcmp.lt.s32.totalorder %v295, 0
      %v298 = vsub.s32 0, %v295
      %v299 = vsel %vm297, %v298, %v295
      %v300 = vshrl.u32 %v299, 4
      %v301 = vand.u32 %v299, 15
      %v302 = vsub.s32 0, %v301
      %v303 = vsel %vm297, %v302, %v301
      %vm304 = vcmp.lt.s32.totalorder %v296, 0
      %v305 = vsub.s32 0, %v296
      %v306 = vsel %vm304, %v305, %v296
      %v307 = vshrl.u32 %v306, 4
      %v308 = vand.u32 %v306, 15
      %v309 = vsub.s32 0, %v308
      %v310 = vsel %vm304, %v309, %v308
      %vm311 = vcmp.ne.s32.totalorder %v303, 0
      %vm312 = vcmp.ne.s32.totalorder %v310, 0
      %vm313 = vcmp.lt.s32.totalorder %v303, 0
      %vm314 = vcmp.lt.s32.totalorder %v310, 0
      %vm315 = vmand %vm313, %vm311
      %vm316 = vmand %vm314, %vm312
      %v317 = vadd.s32 %v303, 16
      %v318 = vadd.s32 %v310, 16
      %v319 = vsel %vm315, %v317, %v303
      %v320 = vsel %vm316, %v318, %v310
      %v321 = vld [vmem:[#allocation2] sm:$0x77]
      %v322 = vld [vmem:[#allocation2 + $0x8] sm:$0x7]
      %v323 = vadd.s32 %v319, 4294967295
      %v324 = vadd.s32 %v320, 4294967295
      %vm325 = vcmp.ge.s32.totalorder %v323, 0
      %vm326 = vcmp.ge.s32.totalorder %v324, 0
      %vm327 = vcmp.lt.s32.totalorder %v323, 16
      %vm328 = vcmp.lt.s32.totalorder %v324, 16
      %vm329 = vmand %vm325, %vm327
      %vm330 = vmand %vm326, %vm328
      %v331 = vsel %vm329, 1, 0
      %v332 = vsel %vm330, 1, 0
      %vm333 = vcmp.eq.s32.totalorder %v331, 1
      %vm334 = vcmp.eq.s32.totalorder %v332, 1
      %337 = vst [vmem:[#allocation1] ss:$2 sm:$0xff] %v321
      %s338 = scalar_lea.vmem [#allocation1], 16
      %339 = vst [vmem:[%s338] ss:$2 sm:$0xff] %v322
      %v340 = vld.sshfl [vmem:[#allocation1] sm:$0xff pattern:$0x75316420]
      %v341 = vld.sshfl [vmem:[#allocation1 + $0x8] sm:$0xff pattern:$0x75316420]
      %v342 = vld.sshfl [vmem:[#allocation1 + $0x10] sm:$0xff pattern:$0x75316420]
      %343 = vrot.lane.b32.xlu0 %v340, 17
      %v344 = vpop.permute.xlu0 %343
      %345 = vrot.lane.b32.xlu0 %v341, 17
      %v346 = vpop.permute.xlu0 %345
      %347 = vrot.lane.b32.xlu0 %v342, 17
      %v348 = vpop.permute.xlu0 %347
      %vm349 = vcmask 138240
      %v350 = vsel %vm349, %v344, %v346
      %v351 = vsel %vm349, %v346, %v348
      %v354 = vsel %vm333, %v350, 0.0
      %v355 = vsel %vm334, %v351, 0.0
      %356 = vst [vmem:[#allocation3] sm:$0x7] %v354
      %357 = vst [vmem:[#allocation3 + $0x8] sm:$0x7] %v355
      %v358 = vld [vmem:[#allocation2] sm:$0x77]
      %v359 = vld [vmem:[#allocation2 + $0x8] sm:$0x7]
      %362 = vst [vmem:[#allocation1] ss:$2 sm:$0xff] %v358
      %s363 = scalar_lea.vmem [#allocation1], 16
      %364 = vst [vmem:[%s363] ss:$2 sm:$0xff] %v359
      %v365 = vld.sshfl [vmem:[#allocation1] sm:$0xff pattern:$0x75316420]
      %v366 = vld.sshfl [vmem:[#allocation1 + $0x8] sm:$0xff pattern:$0x75316420]
      %v367 = vld.sshfl [vmem:[#allocation1 + $0x10] sm:$0xff pattern:$0x75316420]
      %368 = vrot.lane.b32.xlu0 %v365, 16
      %v369 = vpop.permute.xlu0 %368
      %370 = vrot.lane.b32.xlu0 %v366, 16
      %v371 = vpop.permute.xlu0 %370
      %372 = vrot.lane.b32.xlu0 %v367, 16
      %v373 = vpop.permute.xlu0 %372
      %vm374 = vcmask 130048
      %v375 = vsel %vm374, %v369, %v371
      %v376 = vsel %vm374, %v371, %v373
      %379 = vst [vmem:[#allocation3 + $0x10] sm:$0x7] %v375
      %380 = vst [vmem:[#allocation3 + $0x18] sm:$0x7] %v376
      %v381 = vld [vmem:[#allocation2] sm:$0x77]
      %v382 = vld [vmem:[#allocation2 + $0x8] sm:$0x7]
      %v383 = vadd.s32 %v319, 1
      %v384 = vadd.s32 %v320, 1
      %vm385 = vcmp.ge.s32.totalorder %v383, 0
      %vm386 = vcmp.ge.s32.totalorder %v384, 0
      %vm387 = vcmp.lt.s32.totalorder %v383, 16
      %vm388 = vcmp.lt.s32.totalorder %v384, 16
      %vm389 = vmand %vm385, %vm387
      %vm390 = vmand %vm386, %vm388
      %v391 = vsel %vm389, 1, 0
      %v392 = vsel %vm390, 1, 0
      %vm393 = vcmp.eq.s32.totalorder %v391, 1
      %vm394 = vcmp.eq.s32.totalorder %v392, 1
      %397 = vst [vmem:[#allocation1] ss:$2 sm:$0xff] %v381
      %s398 = scalar_lea.vmem [#allocation1], 16
      %399 = vst [vmem:[%s398] ss:$2 sm:$0xff] %v382
      %v400 = vld.sshfl [vmem:[#allocation1] sm:$0xff pattern:$0x75316420]
      %v401 = vld.sshfl [vmem:[#allocation1 + $0x8] sm:$0xff pattern:$0x75316420]
      %v402 = vld.sshfl [vmem:[#allocation1 + $0x10] sm:$0xff pattern:$0x75316420]
      %403 = vrot.lane.b32.xlu0 %v400, 15
      %v404 = vpop.permute.xlu0 %403
      %405 = vrot.lane.b32.xlu0 %v401, 15
      %v406 = vpop.permute.xlu0 %405
      %407 = vrot.lane.b32.xlu0 %v402, 15
      %v408 = vpop.permute.xlu0 %407
      %vm409 = vcmask 121856
      %v410 = vsel %vm409, %v404, %v406
      %v411 = vsel %vm409, %v406, %v408
      %v414 = vsel %vm393, %v410, 0.0
      %v415 = vsel %vm394, %v411, 0.0
      %416 = vst [vmem:[#allocation3 + $0x20] sm:$0x7] %v414
      %417 = vst [vmem:[#allocation3 + $0x28] sm:$0x7] %v415
      %v418 = vld [vmem:[#allocation2] sm:$0x77]
      %v419 = vld [vmem:[#allocation2 + $0x8] sm:$0x7]
      %422 = vst [vmem:[#allocation1] ss:$2 sm:$0xff] %v418
      %s423 = scalar_lea.vmem [#allocation1], 16
      %424 = vst [vmem:[%s423] ss:$2 sm:$0xff] %v419
      %v425 = vld.sshfl [vmem:[#allocation1] sm:$0xff pattern:$0x75316420]
      %v426 = vld.sshfl [vmem:[#allocation1 + $0x8] sm:$0xff pattern:$0x75316420]
      %v427 = vld.sshfl [vmem:[#allocation1 + $0x10] sm:$0xff pattern:$0x75316420]
      %428 = vrot.lane.b32.xlu0 %v425, 1
      %v429 = vpop.permute.xlu0 %428
      %430 = vrot.lane.b32.xlu0 %v426, 1
      %v431 = vpop.permute.xlu0 %430
      %432 = vrot.lane.b32.xlu0 %v427, 1
      %v433 = vpop.permute.xlu0 %432
      %vm434 = vcmask 7168
      %v435 = vsel %vm434, %v429, %v431
      %v436 = vsel %vm434, %v431, %v433
      %v439 = vsel %vm333, %v435, 0.0
      %v440 = vsel %vm334, %v436, 0.0
      %441 = vst [vmem:[#allocation3 + $0x30] sm:$0x7] %v439
      %442 = vst [vmem:[#allocation3 + $0x38] sm:$0x7] %v440
      %v443 = vld [vmem:[#allocation2 + $0x4] sm:$0x77]
      %445 = vst [vmem:[#allocation1] ss:$2 sm:$0xff] %v443
      %v446 = vld.sshfl [vmem:[#allocation1] sm:$0xff pattern:$0x75316420]
      %v447 = vld.sshfl [vmem:[#allocation1 + $0x8] sm:$0xff pattern:$0x75316420]
      %450 = vst [vmem:[#allocation3 + $0x40] sm:$0x7] %v446
      %451 = vst [vmem:[#allocation3 + $0x48] sm:$0x7] %v447
      %v452 = vld [vmem:[#allocation2 + $0x4] sm:$0x77]
      %v453 = vld [vmem:[#allocation2 + $0xc] sm:$0x7]
      %456 = vst [vmem:[#allocation1] ss:$2 sm:$0xff] %v452
      %s457 = scalar_lea.vmem [#allocation1], 16
      %458 = vst [vmem:[%s457] ss:$2 sm:$0xff] %v453
      %v459 = vld.sshfl [vmem:[#allocation1] sm:$0xff pattern:$0x75316420]
      %v460 = vld.sshfl [vmem:[#allocation1 + $0x8] sm:$0xff pattern:$0x75316420]
      %v461 = vld.sshfl [vmem:[#allocation1 + $0x10] sm:$0xff pattern:$0x75316420]
      %462 = vrot.lane.b32.xlu0 %v459, 127
      %v463 = vpop.permute.xlu0 %462
      %464 = vrot.lane.b32.xlu0 %v460, 127
      %v465 = vpop.permute.xlu0 %464
      %466 = vrot.lane.b32.xlu0 %v461, 127
      %v467 = vpop.permute.xlu0 %466
      %vm468 = vcmask 1039360
      %v469 = vsel %vm468, %v463, %v465
      %v470 = vsel %vm468, %v465, %v467
      %v473 = vsel %vm393, %v469, 0.0
      %v474 = vsel %vm394, %v470, 0.0
      %475 = vst [vmem:[#allocation3 + $0x50] sm:$0x7] %v473
      %476 = vst [vmem:[#allocation3 + $0x58] sm:$0x7] %v474
      %v477 = vld [vmem:[#allocation2 + $0x4] sm:$0x77]
      %v478 = vld [vmem:[#allocation2 + $0xc] sm:$0x7]
      %481 = vst [vmem:[#allocation1] ss:$2 sm:$0xff] %v477
      %s482 = scalar_lea.vmem [#allocation1], 16
      %483 = vst [vmem:[%s482] ss:$2 sm:$0xff] %v478
      %v484 = vld.sshfl [vmem:[#allocation1] sm:$0xff pattern:$0x75316420]
      %v485 = vld.sshfl [vmem:[#allocation1 + $0x8] sm:$0xff pattern:$0x75316420]
      %v486 = vld.sshfl [vmem:[#allocation1 + $0x10] sm:$0xff pattern:$0x75316420]
      %487 = vrot.lane.b32.xlu0 %v484, 113
      %v488 = vpop.permute.xlu0 %487
      %489 = vrot.lane.b32.xlu0 %v485, 113
      %v490 = vpop.permute.xlu0 %489
      %491 = vrot.lane.b32.xlu0 %v486, 113
      %v492 = vpop.permute.xlu0 %491
      %vm493 = vcmask 924672
      %v494 = vsel %vm493, %v488, %v490
      %v495 = vsel %vm493, %v490, %v492
      %v498 = vsel %vm333, %v494, 0.0
      %v499 = vsel %vm334, %v495, 0.0
      %500 = vst [vmem:[#allocation3 + $0x60] sm:$0x7] %v498
      %501 = vst [vmem:[#allocation3 + $0x68] sm:$0x7] %v499
      %v502 = vld [vmem:[#allocation2 + $0x4] sm:$0x77]
      %v503 = vld [vmem:[#allocation2 + $0xc] sm:$0x7]
      %506 = vst [vmem:[#allocation1] ss:$2 sm:$0xff] %v502
      %s507 = scalar_lea.vmem [#allocation1], 16
      %508 = vst [vmem:[%s507] ss:$2 sm:$0xff] %v503
      %v509 = vld.sshfl [vmem:[#allocation1] sm:$0xff pattern:$0x75316420]
      %v510 = vld.sshfl [vmem:[#allocation1 + $0x8] sm:$0xff pattern:$0x75316420]
      %v511 = vld.sshfl [vmem:[#allocation1 + $0x10] sm:$0xff pattern:$0x75316420]
      %512 = vrot.lane.b32.xlu0 %v509, 112
      %v513 = vpop.permute.xlu0 %512
      %514 = vrot.lane.b32.xlu0 %v510, 112
      %v515 = vpop.permute.xlu0 %514
      %516 = vrot.lane.b32.xlu0 %v511, 112
      %v517 = vpop.permute.xlu0 %516
      %vm518 = vcmask 916480
      %v519 = vsel %vm518, %v513, %v515
      %v520 = vsel %vm518, %v515, %v517
      %523 = vst [vmem:[#allocation3 + $0x70] sm:$0x7] %v519
      %524 = vst [vmem:[#allocation3 + $0x78] sm:$0x7] %v520
      %v525 = vld [vmem:[#allocation2 + $0x4] sm:$0x77]
      %v526 = vld [vmem:[#allocation2 + $0xc] sm:$0x7]
      %529 = vst [vmem:[#allocation1] ss:$2 sm:$0xff] %v525
      %s530 = scalar_lea.vmem [#allocation1], 16
      %531 = vst [vmem:[%s530] ss:$2 sm:$0xff] %v526
      %v532 = vld.sshfl [vmem:[#allocation1] sm:$0xff pattern:$0x75316420]
      %v533 = vld.sshfl [vmem:[#allocation1 + $0x8] sm:$0xff pattern:$0x75316420]
      %v534 = vld.sshfl [vmem:[#allocation1 + $0x10] sm:$0xff pattern:$0x75316420]
      %535 = vrot.lane.b32.xlu0 %v532, 111
      %v536 = vpop.permute.xlu0 %535
      %537 = vrot.lane.b32.xlu0 %v533, 111
      %v538 = vpop.permute.xlu0 %537
      %539 = vrot.lane.b32.xlu0 %v534, 111
      %v540 = vpop.permute.xlu0 %539
      %vm541 = vcmask 908288
      %v542 = vsel %vm541, %v536, %v538
      %v543 = vsel %vm541, %v538, %v540
      %v546 = vsel %vm393, %v542, 0.0
      %v547 = vsel %vm394, %v543, 0.0
      %548 = vst [vmem:[#allocation3 + $0x80] sm:$0x7] %v546
      %549 = vst [vmem:[#allocation3 + $0x88] sm:$0x7] %v547
      %v550 = vld [vmem:[%s2] sm:$0xff]
      %v551 = vld [vmem:[%s2 + $0x8] sm:$0xff]
      %v552 = vld [vmem:[%s2 + $0x10] sm:$0xff]
      %v553 = vld [vmem:[%s2 + $0x18] sm:$0xff]
      %v554 = vld [vmem:[#allocation3] sm:$0xff]
      %v555 = vld [vmem:[#allocation3 + $0x8] sm:$0xff]
      %v556 = vld [vmem:[#allocation3 + $0x10] sm:$0xff]
      %v557 = vld [vmem:[#allocation3 + $0x18] sm:$0xff]
      %v558 = vld [vmem:[#allocation3 + $0x20] sm:$0xff]
      %v559 = vld [vmem:[#allocation3 + $0x28] sm:$0xff]
      %v560 = vld [vmem:[#allocation3 + $0x30] sm:$0xff]
      %v561 = vld [vmem:[#allocation3 + $0x38] sm:$0xff]
      %v562 = vld [vmem:[#allocation3 + $0x40] sm:$0xff]
      %v563 = vld [vmem:[#allocation3 + $0x48] sm:$0xff]
      %v564 = vld [vmem:[#allocation3 + $0x50] sm:$0xff]
      %v565 = vld [vmem:[#allocation3 + $0x58] sm:$0xff]
      %v566 = vld [vmem:[#allocation3 + $0x60] sm:$0xff]
      %v567 = vld [vmem:[#allocation3 + $0x68] sm:$0xff]
      %v568 = vld [vmem:[#allocation3 + $0x70] sm:$0xff]
      %v569 = vld [vmem:[#allocation3 + $0x78] sm:$0xff]
      %v570 = vld [vmem:[#allocation3 + $0x80] sm:$0xff]
      %v571 = vld [vmem:[#allocation3 + $0x88] sm:$0xff]
      %v572 = vld [vmem:[%s3] sm:$0xff]
      %v573 = vld [vmem:[%s3 + $0x8] sm:$0xff]
      %v574 = vld [vmem:[%s3 + $0x10] sm:$0xff]
      %v575 = vld [vmem:[%s3 + $0x18] sm:$0xff]
      %577 = vset.pattern.permute.xlu0 0
      %578 = vperm.xlu0 %577, %v572
      %v579 = vpop.permute.xlu0 %578
      %582 = vset.pattern.permute.xlu0 0
      %583 = vperm.xlu0 %582, %v573
      %v584 = vpop.permute.xlu0 %583
      %587 = vset.pattern.permute.xlu0 0
      %588 = vperm.xlu0 %587, %v574
      %v589 = vpop.permute.xlu0 %588
      %592 = vset.pattern.permute.xlu0 0
      %593 = vperm.xlu0 %592, %v575
      %v594 = vpop.permute.xlu0 %593
      %vm596 = vcmask 588800
      %v598 = vsel %vm596, %v550, 0
      %v601 = vsel %vm596, %v551, 0
      %v604 = vsel %vm596, %v552, 0
      %v607 = vsel %vm596, %v553, 0
      %609 = vmatpush.msra.mxu0 0.0
      %610 = vmatpush.msra.mxu0 0.0
      %611 = vmatpush.msra.mxu0 0.0
      %612 = vmatpush.msra.mxu0 0.0
      %613 = vmatpush.msra.mxu0 0.0
      %614 = vmatpush.msra.mxu0 0.0
      %615 = vmatpush.msra.mxu0 0.0
      %616 = vmatpush.msra.mxu0 %v570
      %617 = vmatpush.msra.mxu0 %v568
      %618 = vmatpush.msra.mxu0 %v566
      %619 = vmatpush.msra.mxu0 %v564
      %620 = vmatpush.msra.mxu0 %v562
      %621 = vmatpush.msra.mxu0 %v560
      %622 = vmatpush.msra.mxu0 %v558
      %623 = vmatpush.msra.mxu0 %v556
      %624 = vmatpush.msra.mxu0 %v554
      %625 = vmatmul.f32.gmra.mxu0 %v598
      %v626 = vpop.f32.mrf.mxu0
      %v627 = vadd.f32 %v579, %v626
      %628 = vmatmul.f32.gmra.mxu0 %v601
      %v629 = vpop.f32.mrf.mxu0
      %v630 = vadd.f32 %v584, %v629
      %631 = vmatmul.f32.gmra.mxu0 %v604
      %v632 = vpop.f32.mrf.mxu0
      %v633 = vadd.f32 %v589, %v632
      %634 = vmatmul.f32.gmra.mxu0 %v607
      %v635 = vpop.f32.mrf.mxu0
      %v636 = vadd.f32 %v594, %v635
      %637 = vdwg.mxu0
      %638 = vmatpush.msra.mxu0 0.0
      %639 = vmatpush.msra.mxu0 0.0
      %640 = vmatpush.msra.mxu0 0.0
      %641 = vmatpush.msra.mxu0 0.0
      %642 = vmatpush.msra.mxu0 0.0
      %643 = vmatpush.msra.mxu0 0.0
      %644 = vmatpush.msra.mxu0 0.0
      %645 = vmatpush.msra.mxu0 %v571
      %646 = vmatpush.msra.mxu0 %v569
      %647 = vmatpush.msra.mxu0 %v567
      %648 = vmatpush.msra.mxu0 %v565
      %649 = vmatpush.msra.mxu0 %v563
      %650 = vmatpush.msra.mxu0 %v561
      %651 = vmatpush.msra.mxu0 %v559
      %652 = vmatpush.msra.mxu0 %v557
      %653 = vmatpush.msra.mxu0 %v555
      %654 = vmatmul.f32.gmra.mxu0 %v598
      %v655 = vpop.f32.mrf.mxu0
      %v656 = vadd.f32 %v579, %v655
      %657 = vmatmul.f32.gmra.mxu0 %v601
      %v658 = vpop.f32.mrf.mxu0
      %v659 = vadd.f32 %v584, %v658
      %660 = vmatmul.f32.gmra.mxu0 %v604
      %v661 = vpop.f32.mrf.mxu0
      %v662 = vadd.f32 %v589, %v661
      %663 = vmatmul.f32.gmra.mxu0 %v607
      %v664 = vpop.f32.mrf.mxu0
      %v665 = vadd.f32 %v594, %v664
      %666 = vdwg.mxu0
      %v667 = vmax.f32 %v627, 0.0
      %v668 = vmax.f32 %v656, 0.0
      %v669 = vmax.f32 %v630, 0.0
      %v670 = vmax.f32 %v659, 0.0
      %v671 = vmax.f32 %v633, 0.0
      %v672 = vmax.f32 %v662, 0.0
      %v673 = vmax.f32 %v636, 0.0
      %v674 = vmax.f32 %v665, 0.0
      %675 = vst [vmem:[#allocation4] sm:$0xff] 0.0
      %676 = vst [vmem:[#allocation4 + $0x8] sm:$0xff] 0.0
      %677 = vst [vmem:[#allocation4 + $0x10] sm:$0xff] 0.0
      %678 = vst [vmem:[#allocation4 + $0x18] sm:$0xff] 0.0
      %679 = vst [vmem:[#allocation4 + $0x20] sm:$0xff] 0.0
      %680 = vst [vmem:[#allocation4 + $0x28] sm:$0xff] 0.0
      %681 = vst [vmem:[#allocation4 + $0x30] sm:$0xff] 0.0
      %682 = vst [vmem:[#allocation4 + $0x38] sm:$0xff] 0.0
      %683 = vst [vmem:[#allocation4 + $0x40] sm:$0xff] 0.0
      %684 = vst [vmem:[#allocation4 + $0x48] sm:$0xff] 0.0
      %685 = vst [vmem:[#allocation4 + $0x50] sm:$0xff] 0.0
      %686 = vst [vmem:[#allocation4 + $0x58] sm:$0xff] 0.0
      %687 = vst [vmem:[#allocation4 + $0x60] sm:$0xff] 0.0
      %688 = vst [vmem:[#allocation4 + $0x68] sm:$0xff] 0.0
      %689 = vst [vmem:[#allocation4 + $0x70] sm:$0xff] 0.0
      %690 = vst [vmem:[#allocation4 + $0x78] sm:$0xff] 0.0
      %691 = vst [vmem:[#allocation4 + $0x8] sm:$0xff] %v667
      %692 = vst [vmem:[#allocation4 + $0x10] sm:$0xff] %v668
      %693 = vst [vmem:[#allocation4 + $0x28] sm:$0xff] %v669
      %694 = vst [vmem:[#allocation4 + $0x30] sm:$0xff] %v670
      %695 = vst [vmem:[#allocation4 + $0x48] sm:$0xff] %v671
      %696 = vst [vmem:[#allocation4 + $0x50] sm:$0xff] %v672
      %697 = vst [vmem:[#allocation4 + $0x68] sm:$0xff] %v673
      %698 = vst [vmem:[#allocation4 + $0x70] sm:$0xff] %v674
      %v699 = vld [vmem:[#allocation4] sm:$0xff]
      %v700 = vld [vmem:[#allocation4 + $0x8] sm:$0xff]
      %v701 = vld [vmem:[#allocation4 + $0x10] sm:$0xff]
      %v702 = vld [vmem:[#allocation4 + $0x20] sm:$0xff]
      %v703 = vld [vmem:[#allocation4 + $0x28] sm:$0xff]
      %v704 = vld [vmem:[#allocation4 + $0x30] sm:$0xff]
      %v705 = vld [vmem:[#allocation4 + $0x40] sm:$0xff]
      %v706 = vld [vmem:[#allocation4 + $0x48] sm:$0xff]
      %v707 = vld [vmem:[#allocation4 + $0x50] sm:$0xff]
      %v708 = vld [vmem:[#allocation4 + $0x60] sm:$0xff]
      %v709 = vld [vmem:[#allocation4 + $0x68] sm:$0xff]
      %v710 = vld [vmem:[#allocation4 + $0x70] sm:$0xff]
      %723 = vrot.lane.b32.xlu0 %v699, 17
      %v724 = vpop.permute.xlu0 %723
      %725 = vrot.lane.b32.xlu0 %v700, 17
      %v726 = vpop.permute.xlu0 %725
      %727 = vrot.lane.b32.xlu0 %v701, 17
      %v728 = vpop.permute.xlu0 %727
      %729 = vrot.lane.b32.xlu0 %v702, 17
      %v730 = vpop.permute.xlu0 %729
      %731 = vrot.lane.b32.xlu0 %v703, 17
      %v732 = vpop.permute.xlu0 %731
      %733 = vrot.lane.b32.xlu0 %v704, 17
      %v734 = vpop.permute.xlu0 %733
      %735 = vrot.lane.b32.xlu0 %v705, 17
      %v736 = vpop.permute.xlu0 %735
      %737 = vrot.lane.b32.xlu0 %v706, 17
      %v738 = vpop.permute.xlu0 %737
      %739 = vrot.lane.b32.xlu0 %v707, 17
      %v740 = vpop.permute.xlu0 %739
      %741 = vrot.lane.b32.xlu0 %v708, 17
      %v742 = vpop.permute.xlu0 %741
      %743 = vrot.lane.b32.xlu0 %v709, 17
      %v744 = vpop.permute.xlu0 %743
      %745 = vrot.lane.b32.xlu0 %v710, 17
      %v746 = vpop.permute.xlu0 %745
      %v747 = vsel %vm349, %v724, %v726
      %v748 = vsel %vm349, %v726, %v728
      %v749 = vsel %vm349, %v730, %v732
      %v750 = vsel %vm349, %v732, %v734
      %v751 = vsel %vm349, %v736, %v738
      %v752 = vsel %vm349, %v738, %v740
      %v753 = vsel %vm349, %v742, %v744
      %v754 = vsel %vm349, %v744, %v746
      %v763 = vsel %vm333, %v747, 0.0
      %v764 = vsel %vm334, %v748, 0.0
      %v765 = vsel %vm333, %v749, 0.0
      %v766 = vsel %vm334, %v750, 0.0
      %v767 = vsel %vm333, %v751, 0.0
      %v768 = vsel %vm334, %v752, 0.0
      %v769 = vsel %vm333, %v753, 0.0
      %v770 = vsel %vm334, %v754, 0.0
      %771 = vst [vmem:[#allocation5] sm:$0xff] %v763
      %772 = vst [vmem:[#allocation5 + $0x8] sm:$0xff] %v764
      %773 = vst [vmem:[#allocation5 + $0x10] sm:$0xff] %v765
      %774 = vst [vmem:[#allocation5 + $0x18] sm:$0xff] %v766
      %775 = vst [vmem:[#allocation5 + $0x20] sm:$0xff] %v767
      %776 = vst [vmem:[#allocation5 + $0x28] sm:$0xff] %v768
      %777 = vst [vmem:[#allocation5 + $0x30] sm:$0xff] %v769
      %778 = vst [vmem:[#allocation5 + $0x38] sm:$0xff] %v770
      %v779 = vld [vmem:[#allocation4] sm:$0xff]
      %v780 = vld [vmem:[#allocation4 + $0x8] sm:$0xff]
      %v781 = vld [vmem:[#allocation4 + $0x10] sm:$0xff]
      %v782 = vld [vmem:[#allocation4 + $0x20] sm:$0xff]
      %v783 = vld [vmem:[#allocation4 + $0x28] sm:$0xff]
      %v784 = vld [vmem:[#allocation4 + $0x30] sm:$0xff]
      %v785 = vld [vmem:[#allocation4 + $0x40] sm:$0xff]
      %v786 = vld [vmem:[#allocation4 + $0x48] sm:$0xff]
      %v787 = vld [vmem:[#allocation4 + $0x50] sm:$0xff]
      %v788 = vld [vmem:[#allocation4 + $0x60] sm:$0xff]
      %v789 = vld [vmem:[#allocation4 + $0x68] sm:$0xff]
      %v790 = vld [vmem:[#allocation4 + $0x70] sm:$0xff]
      %803 = vrot.lane.b32.xlu0 %v779, 16
      %v804 = vpop.permute.xlu0 %803
      %805 = vrot.lane.b32.xlu0 %v780, 16
      %v806 = vpop.permute.xlu0 %805
      %807 = vrot.lane.b32.xlu0 %v781, 16
      %v808 = vpop.permute.xlu0 %807
      %809 = vrot.lane.b32.xlu0 %v782, 16
      %v810 = vpop.permute.xlu0 %809
      %811 = vrot.lane.b32.xlu0 %v783, 16
      %v812 = vpop.permute.xlu0 %811
      %813 = vrot.lane.b32.xlu0 %v784, 16
      %v814 = vpop.permute.xlu0 %813
      %815 = vrot.lane.b32.xlu0 %v785, 16
      %v816 = vpop.permute.xlu0 %815
      %817 = vrot.lane.b32.xlu0 %v786, 16
      %v818 = vpop.permute.xlu0 %817
      %819 = vrot.lane.b32.xlu0 %v787, 16
      %v820 = vpop.permute.xlu0 %819
      %821 = vrot.lane.b32.xlu0 %v788, 16
      %v822 = vpop.permute.xlu0 %821
      %823 = vrot.lane.b32.xlu0 %v789, 16
      %v824 = vpop.permute.xlu0 %823
      %825 = vrot.lane.b32.xlu0 %v790, 16
      %v826 = vpop.permute.xlu0 %825
      %v827 = vsel %vm374, %v804, %v806
      %v828 = vsel %vm374, %v806, %v808
      %v829 = vsel %vm374, %v810, %v812
      %v830 = vsel %vm374, %v812, %v814
      %v831 = vsel %vm374, %v816, %v818
      %v832 = vsel %vm374, %v818, %v820
      %v833 = vsel %vm374, %v822, %v824
      %v834 = vsel %vm374, %v824, %v826
      %843 = vst [vmem:[#allocation5 + $0x40] sm:$0xff] %v827
      %844 = vst [vmem:[#allocation5 + $0x48] sm:$0xff] %v828
      %845 = vst [vmem:[#allocation5 + $0x50] sm:$0xff] %v829
      %846 = vst [vmem:[#allocation5 + $0x58] sm:$0xff] %v830
      %847 = vst [vmem:[#allocation5 + $0x60] sm:$0xff] %v831
      %848 = vst [vmem:[#allocation5 + $0x68] sm:$0xff] %v832
      %849 = vst [vmem:[#allocation5 + $0x70] sm:$0xff] %v833
      %850 = vst [vmem:[#allocation5 + $0x78] sm:$0xff] %v834
      %v851 = vld [vmem:[#allocation4] sm:$0xff]
      %v852 = vld [vmem:[#allocation4 + $0x8] sm:$0xff]
      %v853 = vld [vmem:[#allocation4 + $0x10] sm:$0xff]
      %v854 = vld [vmem:[#allocation4 + $0x20] sm:$0xff]
      %v855 = vld [vmem:[#allocation4 + $0x28] sm:$0xff]
      %v856 = vld [vmem:[#allocation4 + $0x30] sm:$0xff]
      %v857 = vld [vmem:[#allocation4 + $0x40] sm:$0xff]
      %v858 = vld [vmem:[#allocation4 + $0x48] sm:$0xff]
      %v859 = vld [vmem:[#allocation4 + $0x50] sm:$0xff]
      %v860 = vld [vmem:[#allocation4 + $0x60] sm:$0xff]
      %v861 = vld [vmem:[#allocation4 + $0x68] sm:$0xff]
      %v862 = vld [vmem:[#allocation4 + $0x70] sm:$0xff]
      %875 = vrot.lane.b32.xlu0 %v851, 15
      %v876 = vpop.permute.xlu0 %875
      %877 = vrot.lane.b32.xlu0 %v852, 15
      %v878 = vpop.permute.xlu0 %877
      %879 = vrot.lane.b32.xlu0 %v853, 15
      %v880 = vpop.permute.xlu0 %879
      %881 = vrot.lane.b32.xlu0 %v854, 15
      %v882 = vpop.permute.xlu0 %881
      %883 = vrot.lane.b32.xlu0 %v855, 15
      %v884 = vpop.permute.xlu0 %883
      %885 = vrot.lane.b32.xlu0 %v856, 15
      %v886 = vpop.permute.xlu0 %885
      %887 = vrot.lane.b32.xlu0 %v857, 15
      %v888 = vpop.permute.xlu0 %887
      %889 = vrot.lane.b32.xlu0 %v858, 15
      %v890 = vpop.permute.xlu0 %889
      %891 = vrot.lane.b32.xlu0 %v859, 15
      %v892 = vpop.permute.xlu0 %891
      %893 = vrot.lane.b32.xlu0 %v860, 15
      %v894 = vpop.permute.xlu0 %893
      %895 = vrot.lane.b32.xlu0 %v861, 15
      %v896 = vpop.permute.xlu0 %895
      %897 = vrot.lane.b32.xlu0 %v862, 15
      %v898 = vpop.permute.xlu0 %897
      %v899 = vsel %vm409, %v876, %v878
      %v900 = vsel %vm409, %v878, %v880
      %v901 = vsel %vm409, %v882, %v884
      %v902 = vsel %vm409, %v884, %v886
      %v903 = vsel %vm409, %v888, %v890
      %v904 = vsel %vm409, %v890, %v892
      %v905 = vsel %vm409, %v894, %v896
      %v906 = vsel %vm409, %v896, %v898
      %v915 = vsel %vm393, %v899, 0.0
      %v916 = vsel %vm394, %v900, 0.0
      %v917 = vsel %vm393, %v901, 0.0
      %v918 = vsel %vm394, %v902, 0.0
      %v919 = vsel %vm393, %v903, 0.0
      %v920 = vsel %vm394, %v904, 0.0
      %v921 = vsel %vm393, %v905, 0.0
      %v922 = vsel %vm394, %v906, 0.0
      %923 = vst [vmem:[#allocation5 + $0x80] sm:$0xff] %v915
      %924 = vst [vmem:[#allocation5 + $0x88] sm:$0xff] %v916
      %925 = vst [vmem:[#allocation5 + $0x90] sm:$0xff] %v917
      %926 = vst [vmem:[#allocation5 + $0x98] sm:$0xff] %v918
      %927 = vst [vmem:[#allocation5 + $0xa0] sm:$0xff] %v919
      %928 = vst [vmem:[#allocation5 + $0xa8] sm:$0xff] %v920
      %929 = vst [vmem:[#allocation5 + $0xb0] sm:$0xff] %v921
      %930 = vst [vmem:[#allocation5 + $0xb8] sm:$0xff] %v922
      %v931 = vld [vmem:[#allocation4] sm:$0xff]
      %v932 = vld [vmem:[#allocation4 + $0x8] sm:$0xff]
      %v933 = vld [vmem:[#allocation4 + $0x10] sm:$0xff]
      %v934 = vld [vmem:[#allocation4 + $0x20] sm:$0xff]
      %v935 = vld [vmem:[#allocation4 + $0x28] sm:$0xff]
      %v936 = vld [vmem:[#allocation4 + $0x30] sm:$0xff]
      %v937 = vld [vmem:[#allocation4 + $0x40] sm:$0xff]
      %v938 = vld [vmem:[#allocation4 + $0x48] sm:$0xff]
      %v939 = vld [vmem:[#allocation4 + $0x50] sm:$0xff]
      %v940 = vld [vmem:[#allocation4 + $0x60] sm:$0xff]
      %v941 = vld [vmem:[#allocation4 + $0x68] sm:$0xff]
      %v942 = vld [vmem:[#allocation4 + $0x70] sm:$0xff]
      %955 = vrot.lane.b32.xlu0 %v931, 1
      %v956 = vpop.permute.xlu0 %955
      %957 = vrot.lane.b32.xlu0 %v932, 1
      %v958 = vpop.permute.xlu0 %957
      %959 = vrot.lane.b32.xlu0 %v933, 1
      %v960 = vpop.permute.xlu0 %959
      %961 = vrot.lane.b32.xlu0 %v934, 1
      %v962 = vpop.permute.xlu0 %961
      %963 = vrot.lane.b32.xlu0 %v935, 1
      %v964 = vpop.permute.xlu0 %963
      %965 = vrot.lane.b32.xlu0 %v936, 1
      %v966 = vpop.permute.xlu0 %965
      %967 = vrot.lane.b32.xlu0 %v937, 1
      %v968 = vpop.permute.xlu0 %967
      %969 = vrot.lane.b32.xlu0 %v938, 1
      %v970 = vpop.permute.xlu0 %969
      %971 = vrot.lane.b32.xlu0 %v939, 1
      %v972 = vpop.permute.xlu0 %971
      %973 = vrot.lane.b32.xlu0 %v940, 1
      %v974 = vpop.permute.xlu0 %973
      %975 = vrot.lane.b32.xlu0 %v941, 1
      %v976 = vpop.permute.xlu0 %975
      %977 = vrot.lane.b32.xlu0 %v942, 1
      %v978 = vpop.permute.xlu0 %977
      %v979 = vsel %vm434, %v956, %v958
      %v980 = vsel %vm434, %v958, %v960
      %v981 = vsel %vm434, %v962, %v964
      %v982 = vsel %vm434, %v964, %v966
      %v983 = vsel %vm434, %v968, %v970
      %v984 = vsel %vm434, %v970, %v972
      %v985 = vsel %vm434, %v974, %v976
      %v986 = vsel %vm434, %v976, %v978
      %v995 = vsel %vm333, %v979, 0.0
      %v996 = vsel %vm334, %v980, 0.0
      %v997 = vsel %vm333, %v981, 0.0
      %v998 = vsel %vm334, %v982, 0.0
      %v999 = vsel %vm333, %v983, 0.0
      %v1000 = vsel %vm334, %v984, 0.0
      %v1001 = vsel %vm333, %v985, 0.0
      %v1002 = vsel %vm334, %v986, 0.0
      %1003 = vst [vmem:[#allocation5 + $0xc0] sm:$0xff] %v995
      %1004 = vst [vmem:[#allocation5 + $0xc8] sm:$0xff] %v996
      %1005 = vst [vmem:[#allocation5 + $0xd0] sm:$0xff] %v997
      %1006 = vst [vmem:[#allocation5 + $0xd8] sm:$0xff] %v998
      %1007 = vst [vmem:[#allocation5 + $0xe0] sm:$0xff] %v999
      %1008 = vst [vmem:[#allocation5 + $0xe8] sm:$0xff] %v1000
      %1009 = vst [vmem:[#allocation5 + $0xf0] sm:$0xff] %v1001
      %1010 = vst [vmem:[#allocation5 + $0xf8] sm:$0xff] %v1002
      %v1011 = vld [vmem:[#allocation4 + $0x8] sm:$0xff]
      %v1012 = vld [vmem:[#allocation4 + $0x10] sm:$0xff]
      %v1013 = vld [vmem:[#allocation4 + $0x28] sm:$0xff]
      %v1014 = vld [vmem:[#allocation4 + $0x30] sm:$0xff]
      %v1015 = vld [vmem:[#allocation4 + $0x48] sm:$0xff]
      %v1016 = vld [vmem:[#allocation4 + $0x50] sm:$0xff]
      %v1017 = vld [vmem:[#allocation4 + $0x68] sm:$0xff]
      %v1018 = vld [vmem:[#allocation4 + $0x70] sm:$0xff]
      %1019 = vst [vmem:[#allocation5 + $0x100] sm:$0xff] %v1011
      %1020 = vst [vmem:[#allocation5 + $0x108] sm:$0xff] %v1012
      %1021 = vst [vmem:[#allocation5 + $0x110] sm:$0xff] %v1013
      %1022 = vst [vmem:[#allocation5 + $0x118] sm:$0xff] %v1014
      %1023 = vst [vmem:[#allocation5 + $0x120] sm:$0xff] %v1015
      %1024 = vst [vmem:[#allocation5 + $0x128] sm:$0xff] %v1016
      %1025 = vst [vmem:[#allocation5 + $0x130] sm:$0xff] %v1017
      %1026 = vst [vmem:[#allocation5 + $0x138] sm:$0xff] %v1018
      %v1027 = vld [vmem:[#allocation4 + $0x8] sm:$0xff]
      %v1028 = vld [vmem:[#allocation4 + $0x10] sm:$0xff]
      %v1029 = vld [vmem:[#allocation4 + $0x18] sm:$0xff]
      %v1030 = vld [vmem:[#allocation4 + $0x28] sm:$0xff]
      %v1031 = vld [vmem:[#allocation4 + $0x30] sm:$0xff]
      %v1032 = vld [vmem:[#allocation4 + $0x38] sm:$0xff]
      %v1033 = vld [vmem:[#allocation4 + $0x48] sm:$0xff]
      %v1034 = vld [vmem:[#allocation4 + $0x50] sm:$0xff]
      %v1035 = vld [vmem:[#allocation4 + $0x58] sm:$0xff]
      %v1036 = vld [vmem:[#allocation4 + $0x68] sm:$0xff]
      %v1037 = vld [vmem:[#allocation4 + $0x70] sm:$0xff]
      %v1038 = vld [vmem:[#allocation4 + $0x78] sm:$0xff]
      %1051 = vrot.lane.b32.xlu0 %v1027, 127
      %v1052 = vpop.permute.xlu0 %1051
      %1053 = vrot.lane.b32.xlu0 %v1028, 127
      %v1054 = vpop.permute.xlu0 %1053
      %1055 = vrot.lane.b32.xlu0 %v1029, 127
      %v1056 = vpop.permute.xlu0 %1055
      %1057 = vrot.lane.b32.xlu0 %v1030, 127
      %v1058 = vpop.permute.xlu0 %1057
      %1059 = vrot.lane.b32.xlu0 %v1031, 127
      %v1060 = vpop.permute.xlu0 %1059
      %1061 = vrot.lane.b32.xlu0 %v1032, 127
      %v1062 = vpop.permute.xlu0 %1061
      %1063 = vrot.lane.b32.xlu0 %v1033, 127
      %v1064 = vpop.permute.xlu0 %1063
      %1065 = vrot.lane.b32.xlu0 %v1034, 127
      %v1066 = vpop.permute.xlu0 %1065
      %1067 = vrot.lane.b32.xlu0 %v1035, 127
      %v1068 = vpop.permute.xlu0 %1067
      %1069 = vrot.lane.b32.xlu0 %v1036, 127
      %v1070 = vpop.permute.xlu0 %1069
      %1071 = vrot.lane.b32.xlu0 %v1037, 127
      %v1072 = vpop.permute.xlu0 %1071
      %1073 = vrot.lane.b32.xlu0 %v1038, 127
      %v1074 = vpop.permute.xlu0 %1073
      %v1075 = vsel %vm468, %v1052, %v1054
      %v1076 = vsel %vm468, %v1054, %v1056
      %v1077 = vsel %vm468, %v1058, %v1060
      %v1078 = vsel %vm468, %v1060, %v1062
      %v1079 = vsel %vm468, %v1064, %v1066
      %v1080 = vsel %vm468, %v1066, %v1068
      %v1081 = vsel %vm468, %v1070, %v1072
      %v1082 = vsel %vm468, %v1072, %v1074
      %v1091 = vsel %vm393, %v1075, 0.0
      %v1092 = vsel %vm394, %v1076, 0.0
      %v1093 = vsel %vm393, %v1077, 0.0
      %v1094 = vsel %vm394, %v1078, 0.0
      %v1095 = vsel %vm393, %v1079, 0.0
      %v1096 = vsel %vm394, %v1080, 0.0
      %v1097 = vsel %vm393, %v1081, 0.0
      %v1098 = vsel %vm394, %v1082, 0.0
      %1099 = vst [vmem:[#allocation5 + $0x140] sm:$0xff] %v1091
      %1100 = vst [vmem:[#allocation5 + $0x148] sm:$0xff] %v1092
      %1101 = vst [vmem:[#allocation5 + $0x150] sm:$0xff] %v1093
      %1102 = vst [vmem:[#allocation5 + $0x158] sm:$0xff] %v1094
      %1103 = vst [vmem:[#allocation5 + $0x160] sm:$0xff] %v1095
      %1104 = vst [vmem:[#allocation5 + $0x168] sm:$0xff] %v1096
      %1105 = vst [vmem:[#allocation5 + $0x170] sm:$0xff] %v1097
      %1106 = vst [vmem:[#allocation5 + $0x178] sm:$0xff] %v1098
      %v1107 = vld [vmem:[#allocation4 + $0x8] sm:$0xff]
      %v1108 = vld [vmem:[#allocation4 + $0x10] sm:$0xff]
      %v1109 = vld [vmem:[#allocation4 + $0x18] sm:$0xff]
      %v1110 = vld [vmem:[#allocation4 + $0x28] sm:$0xff]
      %v1111 = vld [vmem:[#allocation4 + $0x30] sm:$0xff]
      %v1112 = vld [vmem:[#allocation4 + $0x38] sm:$0xff]
      %v1113 = vld [vmem:[#allocation4 + $0x48] sm:$0xff]
      %v1114 = vld [vmem:[#allocation4 + $0x50] sm:$0xff]
      %v1115 = vld [vmem:[#allocation4 + $0x58] sm:$0xff]
      %v1116 = vld [vmem:[#allocation4 + $0x68] sm:$0xff]
      %v1117 = vld [vmem:[#allocation4 + $0x70] sm:$0xff]
      %v1118 = vld [vmem:[#allocation4 + $0x78] sm:$0xff]
      %1131 = vrot.lane.b32.xlu0 %v1107, 113
      %v1132 = vpop.permute.xlu0 %1131
      %1133 = vrot.lane.b32.xlu0 %v1108, 113
      %v1134 = vpop.permute.xlu0 %1133
      %1135 = vrot.lane.b32.xlu0 %v1109, 113
      %v1136 = vpop.permute.xlu0 %1135
      %1137 = vrot.lane.b32.xlu0 %v1110, 113
      %v1138 = vpop.permute.xlu0 %1137
      %1139 = vrot.lane.b32.xlu0 %v1111, 113
      %v1140 = vpop.permute.xlu0 %1139
      %1141 = vrot.lane.b32.xlu0 %v1112, 113
      %v1142 = vpop.permute.xlu0 %1141
      %1143 = vrot.lane.b32.xlu0 %v1113, 113
      %v1144 = vpop.permute.xlu0 %1143
      %1145 = vrot.lane.b32.xlu0 %v1114, 113
      %v1146 = vpop.permute.xlu0 %1145
      %1147 = vrot.lane.b32.xlu0 %v1115, 113
      %v1148 = vpop.permute.xlu0 %1147
      %1149 = vrot.lane.b32.xlu0 %v1116, 113
      %v1150 = vpop.permute.xlu0 %1149
      %1151 = vrot.lane.b32.xlu0 %v1117, 113
      %v1152 = vpop.permute.xlu0 %1151
      %1153 = vrot.lane.b32.xlu0 %v1118, 113
      %v1154 = vpop.permute.xlu0 %1153
      %v1155 = vsel %vm493, %v1132, %v1134
      %v1156 = vsel %vm493, %v1134, %v1136
      %v1157 = vsel %vm493, %v1138, %v1140
      %v1158 = vsel %vm493, %v1140, %v1142
      %v1159 = vsel %vm493, %v1144, %v1146
      %v1160 = vsel %vm493, %v1146, %v1148
      %v1161 = vsel %vm493, %v1150, %v1152
      %v1162 = vsel %vm493, %v1152, %v1154
      %v1171 = vsel %vm333, %v1155, 0.0
      %v1172 = vsel %vm334, %v1156, 0.0
      %v1173 = vsel %vm333, %v1157, 0.0
      %v1174 = vsel %vm334, %v1158, 0.0
      %v1175 = vsel %vm333, %v1159, 0.0
      %v1176 = vsel %vm334, %v1160, 0.0
      %v1177 = vsel %vm333, %v1161, 0.0
      %v1178 = vsel %vm334, %v1162, 0.0
      %1179 = vst [vmem:[#allocation5 + $0x180] sm:$0xff] %v1171
      %1180 = vst [vmem:[#allocation5 + $0x188] sm:$0xff] %v1172
      %1181 = vst [vmem:[#allocation5 + $0x190] sm:$0xff] %v1173
      %1182 = vst [vmem:[#allocation5 + $0x198] sm:$0xff] %v1174
      %1183 = vst [vmem:[#allocation5 + $0x1a0] sm:$0xff] %v1175
      %1184 = vst [vmem:[#allocation5 + $0x1a8] sm:$0xff] %v1176
      %1185 = vst [vmem:[#allocation5 + $0x1b0] sm:$0xff] %v1177
      %1186 = vst [vmem:[#allocation5 + $0x1b8] sm:$0xff] %v1178
      %v1187 = vld [vmem:[#allocation4 + $0x8] sm:$0xff]
      %v1188 = vld [vmem:[#allocation4 + $0x10] sm:$0xff]
      %v1189 = vld [vmem:[#allocation4 + $0x18] sm:$0xff]
      %v1190 = vld [vmem:[#allocation4 + $0x28] sm:$0xff]
      %v1191 = vld [vmem:[#allocation4 + $0x30] sm:$0xff]
      %v1192 = vld [vmem:[#allocation4 + $0x38] sm:$0xff]
      %v1193 = vld [vmem:[#allocation4 + $0x48] sm:$0xff]
      %v1194 = vld [vmem:[#allocation4 + $0x50] sm:$0xff]
      %v1195 = vld [vmem:[#allocation4 + $0x58] sm:$0xff]
      %v1196 = vld [vmem:[#allocation4 + $0x68] sm:$0xff]
      %v1197 = vld [vmem:[#allocation4 + $0x70] sm:$0xff]
      %v1198 = vld [vmem:[#allocation4 + $0x78] sm:$0xff]
      %1211 = vrot.lane.b32.xlu0 %v1187, 112
      %v1212 = vpop.permute.xlu0 %1211
      %1213 = vrot.lane.b32.xlu0 %v1188, 112
      %v1214 = vpop.permute.xlu0 %1213
      %1215 = vrot.lane.b32.xlu0 %v1189, 112
      %v1216 = vpop.permute.xlu0 %1215
      %1217 = vrot.lane.b32.xlu0 %v1190, 112
      %v1218 = vpop.permute.xlu0 %1217
      %1219 = vrot.lane.b32.xlu0 %v1191, 112
      %v1220 = vpop.permute.xlu0 %1219
      %1221 = vrot.lane.b32.xlu0 %v1192, 112
      %v1222 = vpop.permute.xlu0 %1221
      %1223 = vrot.lane.b32.xlu0 %v1193, 112
      %v1224 = vpop.permute.xlu0 %1223
      %1225 = vrot.lane.b32.xlu0 %v1194, 112
      %v1226 = vpop.permute.xlu0 %1225
      %1227 = vrot.lane.b32.xlu0 %v1195, 112
      %v1228 = vpop.permute.xlu0 %1227
      %1229 = vrot.lane.b32.xlu0 %v1196, 112
      %v1230 = vpop.permute.xlu0 %1229
      %1231 = vrot.lane.b32.xlu0 %v1197, 112
      %v1232 = vpop.permute.xlu0 %1231
      %1233 = vrot.lane.b32.xlu0 %v1198, 112
      %v1234 = vpop.permute.xlu0 %1233
      %v1235 = vsel %vm518, %v1212, %v1214
      %v1236 = vsel %vm518, %v1214, %v1216
      %v1237 = vsel %vm518, %v1218, %v1220
      %v1238 = vsel %vm518, %v1220, %v1222
      %v1239 = vsel %vm518, %v1224, %v1226
      %v1240 = vsel %vm518, %v1226, %v1228
      %v1241 = vsel %vm518, %v1230, %v1232
      %v1242 = vsel %vm518, %v1232, %v1234
      %1251 = vst [vmem:[#allocation5 + $0x1c0] sm:$0xff] %v1235
      %1252 = vst [vmem:[#allocation5 + $0x1c8] sm:$0xff] %v1236
      %1253 = vst [vmem:[#allocation5 + $0x1d0] sm:$0xff] %v1237
      %1254 = vst [vmem:[#allocation5 + $0x1d8] sm:$0xff] %v1238
      %1255 = vst [vmem:[#allocation5 + $0x1e0] sm:$0xff] %v1239
      %1256 = vst [vmem:[#allocation5 + $0x1e8] sm:$0xff] %v1240
      %1257 = vst [vmem:[#allocation5 + $0x1f0] sm:$0xff] %v1241
      %1258 = vst [vmem:[#allocation5 + $0x1f8] sm:$0xff] %v1242
      %v1259 = vld [vmem:[#allocation4 + $0x8] sm:$0xff]
      %v1260 = vld [vmem:[#allocation4 + $0x10] sm:$0xff]
      %v1261 = vld [vmem:[#allocation4 + $0x18] sm:$0xff]
      %v1262 = vld [vmem:[#allocation4 + $0x28] sm:$0xff]
      %v1263 = vld [vmem:[#allocation4 + $0x30] sm:$0xff]
      %v1264 = vld [vmem:[#allocation4 + $0x38] sm:$0xff]
      %v1265 = vld [vmem:[#allocation4 + $0x48] sm:$0xff]
      %v1266 = vld [vmem:[#allocation4 + $0x50] sm:$0xff]
      %v1267 = vld [vmem:[#allocation4 + $0x58] sm:$0xff]
      %v1268 = vld [vmem:[#allocation4 + $0x68] sm:$0xff]
      %v1269 = vld [vmem:[#allocation4 + $0x70] sm:$0xff]
      %v1270 = vld [vmem:[#allocation4 + $0x78] sm:$0xff]
      %1283 = vrot.lane.b32.xlu0 %v1259, 111
      %v1284 = vpop.permute.xlu0 %1283
      %1285 = vrot.lane.b32.xlu0 %v1260, 111
      %v1286 = vpop.permute.xlu0 %1285
      %1287 = vrot.lane.b32.xlu0 %v1261, 111
      %v1288 = vpop.permute.xlu0 %1287
      %1289 = vrot.lane.b32.xlu0 %v1262, 111
      %v1290 = vpop.permute.xlu0 %1289
      %1291 = vrot.lane.b32.xlu0 %v1263, 111
      %v1292 = vpop.permute.xlu0 %1291
      %1293 = vrot.lane.b32.xlu0 %v1264, 111
      %v1294 = vpop.permute.xlu0 %1293
      %1295 = vrot.lane.b32.xlu0 %v1265, 111
      %v1296 = vpop.permute.xlu0 %1295
      %1297 = vrot.lane.b32.xlu0 %v1266, 111
      %v1298 = vpop.permute.xlu0 %1297
      %1299 = vrot.lane.b32.xlu0 %v1267, 111
      %v1300 = vpop.permute.xlu0 %1299
      %1301 = vrot.lane.b32.xlu0 %v1268, 111
      %v1302 = vpop.permute.xlu0 %1301
      %1303 = vrot.lane.b32.xlu0 %v1269, 111
      %v1304 = vpop.permute.xlu0 %1303
      %1305 = vrot.lane.b32.xlu0 %v1270, 111
      %v1306 = vpop.permute.xlu0 %1305
      %v1307 = vsel %vm541, %v1284, %v1286
      %v1308 = vsel %vm541, %v1286, %v1288
      %v1309 = vsel %vm541, %v1290, %v1292
      %v1310 = vsel %vm541, %v1292, %v1294
      %v1311 = vsel %vm541, %v1296, %v1298
      %v1312 = vsel %vm541, %v1298, %v1300
      %v1313 = vsel %vm541, %v1302, %v1304
      %v1314 = vsel %vm541, %v1304, %v1306
      %v1323 = vsel %vm393, %v1307, 0.0
      %v1324 = vsel %vm394, %v1308, 0.0
      %v1325 = vsel %vm393, %v1309, 0.0
      %v1326 = vsel %vm394, %v1310, 0.0
      %v1327 = vsel %vm393, %v1311, 0.0
      %v1328 = vsel %vm394, %v1312, 0.0
      %v1329 = vsel %vm393, %v1313, 0.0
      %v1330 = vsel %vm394, %v1314, 0.0
      %1331 = vst [vmem:[#allocation5 + $0x200] sm:$0xff] %v1323
      %1332 = vst [vmem:[#allocation5 + $0x208] sm:$0xff] %v1324
      %1333 = vst [vmem:[#allocation5 + $0x210] sm:$0xff] %v1325
      %1334 = vst [vmem:[#allocation5 + $0x218] sm:$0xff] %v1326
      %1335 = vst [vmem:[#allocation5 + $0x220] sm:$0xff] %v1327
      %1336 = vst [vmem:[#allocation5 + $0x228] sm:$0xff] %v1328
      %1337 = vst [vmem:[#allocation5 + $0x230] sm:$0xff] %v1329
      %1338 = vst [vmem:[#allocation5 + $0x238] sm:$0xff] %v1330
      %v1339 = vld [vmem:[%s4] sm:$0xff]
      %v1340 = vld [vmem:[%s4 + $0x8] sm:$0xff]
      %v1341 = vld [vmem:[%s4 + $0x10] sm:$0xff]
      %v1342 = vld [vmem:[%s4 + $0x18] sm:$0xff]
      %v1343 = vld [vmem:[%s4 + $0x20] sm:$0xff]
      %v1344 = vld [vmem:[%s4 + $0x28] sm:$0xff]
      %v1345 = vld [vmem:[#allocation5] sm:$0xff]
      %v1346 = vld [vmem:[#allocation5 + $0x8] sm:$0xff]
      %v1347 = vld [vmem:[#allocation5 + $0x10] sm:$0xff]
      %v1348 = vld [vmem:[#allocation5 + $0x18] sm:$0xff]
      %v1349 = vld [vmem:[#allocation5 + $0x20] sm:$0xff]
      %v1350 = vld [vmem:[#allocation5 + $0x28] sm:$0xff]
      %v1351 = vld [vmem:[#allocation5 + $0x30] sm:$0xff]
      %v1352 = vld [vmem:[#allocation5 + $0x38] sm:$0xff]
      %v1353 = vld [vmem:[#allocation5 + $0x40] sm:$0xff]
      %v1354 = vld [vmem:[#allocation5 + $0x48] sm:$0xff]
      %v1355 = vld [vmem:[#allocation5 + $0x50] sm:$0xff]
      %v1356 = vld [vmem:[#allocation5 + $0x58] sm:$0xff]
      %v1357 = vld [vmem:[#allocation5 + $0x60] sm:$0xff]
      %v1358 = vld [vmem:[#allocation5 + $0x68] sm:$0xff]
      %v1359 = vld [vmem:[#allocation5 + $0x70] sm:$0xff]
      %v1360 = vld [vmem:[#allocation5 + $0x78] sm:$0xff]
      %v1361 = vld [vmem:[#allocation5 + $0x80] sm:$0xff]
      %v1362 = vld [vmem:[#allocation5 + $0x88] sm:$0xff]
      %v1363 = vld [vmem:[#allocation5 + $0x90] sm:$0xff]
      %v1364 = vld [vmem:[#allocation5 + $0x98] sm:$0xff]
      %v1365 = vld [vmem:[#allocation5 + $0xa0] sm:$0xff]
      %v1366 = vld [vmem:[#allocation5 + $0xa8] sm:$0xff]
      %v1367 = vld [vmem:[#allocation5 + $0xb0] sm:$0xff]
      %v1368 = vld [vmem:[#allocation5 + $0xb8] sm:$0xff]
      %v1369 = vld [vmem:[#allocation5 + $0xc0] sm:$0xff]
      %v1370 = vld [vmem:[#allocation5 + $0xc8] sm:$0xff]
      %v1371 = vld [vmem:[#allocation5 + $0xd0] sm:$0xff]
      %v1372 = vld [vmem:[#allocation5 + $0xd8] sm:$0xff]
      %v1373 = vld [vmem:[#allocation5 + $0xe0] sm:$0xff]
      %v1374 = vld [vmem:[#allocation5 + $0xe8] sm:$0xff]
      %v1375 = vld [vmem:[#allocation5 + $0xf0] sm:$0xff]
      %v1376 = vld [vmem:[#allocation5 + $0xf8] sm:$0xff]
      %v1377 = vld [vmem:[#allocation5 + $0x100] sm:$0xff]
      %v1378 = vld [vmem:[#allocation5 + $0x108] sm:$0xff]
      %v1379 = vld [vmem:[#allocation5 + $0x110] sm:$0xff]
      %v1380 = vld [vmem:[#allocation5 + $0x118] sm:$0xff]
      %v1381 = vld [vmem:[#allocation5 + $0x120] sm:$0xff]
      %v1382 = vld [vmem:[#allocation5 + $0x128] sm:$0xff]
      %v1383 = vld [vmem:[#allocation5 + $0x130] sm:$0xff]
      %v1384 = vld [vmem:[#allocation5 + $0x138] sm:$0xff]
      %v1385 = vld [vmem:[#allocation5 + $0x140] sm:$0xff]
      %v1386 = vld [vmem:[#allocation5 + $0x148] sm:$0xff]
      %v1387 = vld [vmem:[#allocation5 + $0x150] sm:$0xff]
      %v1388 = vld [vmem:[#allocation5 + $0x158] sm:$0xff]
      %v1389 = vld [vmem:[#allocation5 + $0x160] sm:$0xff]
      %v1390 = vld [vmem:[#allocation5 + $0x168] sm:$0xff]
      %v1391 = vld [vmem:[#allocation5 + $0x170] sm:$0xff]
      %v1392 = vld [vmem:[#allocation5 + $0x178] sm:$0xff]
      %v1393 = vld [vmem:[#allocation5 + $0x180] sm:$0xff]
      %v1394 = vld [vmem:[#allocation5 + $0x188] sm:$0xff]
      %v1395 = vld [vmem:[#allocation5 + $0x190] sm:$0xff]
      %v1396 = vld [vmem:[#allocation5 + $0x198] sm:$0xff]
      %v1397 = vld [vmem:[#allocation5 + $0x1a0] sm:$0xff]
      %v1398 = vld [vmem:[#allocation5 + $0x1a8] sm:$0xff]
      %v1399 = vld [vmem:[#allocation5 + $0x1b0] sm:$0xff]
      %v1400 = vld [vmem:[#allocation5 + $0x1b8] sm:$0xff]
      %v1401 = vld [vmem:[#allocation5 + $0x1c0] sm:$0xff]
      %v1402 = vld [vmem:[#allocation5 + $0x1c8] sm:$0xff]
      %v1403 = vld [vmem:[#allocation5 + $0x1d0] sm:$0xff]
      %v1404 = vld [vmem:[#allocation5 + $0x1d8] sm:$0xff]
      %v1405 = vld [vmem:[#allocation5 + $0x1e0] sm:$0xff]
      %v1406 = vld [vmem:[#allocation5 + $0x1e8] sm:$0xff]
      %v1407 = vld [vmem:[#allocation5 + $0x1f0] sm:$0xff]
      %v1408 = vld [vmem:[#allocation5 + $0x1f8] sm:$0xff]
      %v1409 = vld [vmem:[#allocation5 + $0x200] sm:$0xff]
      %v1410 = vld [vmem:[#allocation5 + $0x208] sm:$0xff]
      %v1411 = vld [vmem:[#allocation5 + $0x210] sm:$0xff]
      %v1412 = vld [vmem:[#allocation5 + $0x218] sm:$0xff]
      %v1413 = vld [vmem:[#allocation5 + $0x220] sm:$0xff]
      %v1414 = vld [vmem:[#allocation5 + $0x228] sm:$0xff]
      %v1415 = vld [vmem:[#allocation5 + $0x230] sm:$0xff]
      %v1416 = vld [vmem:[#allocation5 + $0x238] sm:$0xff]
      %v1417 = vld [vmem:[%s5] sm:$0xff]
      %v1418 = vld [vmem:[%s5 + $0x8] sm:$0xff]
      %1420 = vset.pattern.permute.xlu0 0
      %1421 = vperm.xlu0 %1420, %v1417
      %v1422 = vpop.permute.xlu0 %1421
      %1425 = vset.pattern.permute.xlu0 0
      %1426 = vperm.xlu0 %1425, %v1418
      %v1427 = vpop.permute.xlu0 %1426
      %vm1429 = vcmask 261120
      %v1431 = vsel %vm1429, %v1341, 0
      %v1434 = vsel %vm1429, %v1344, 0
      %1436 = vmatpush.msra.mxu0 %v1375
      %1437 = vmatpush.msra.mxu0 %v1373
      %1438 = vmatpush.msra.mxu0 %v1371
      %1439 = vmatpush.msra.mxu0 %v1369
      %1440 = vmatpush.msra.mxu0 %v1367
      %1441 = vmatpush.msra.mxu0 %v1365
      %1442 = vmatpush.msra.mxu0 %v1363
      %1443 = vmatpush.msra.mxu0 %v1361
      %1444 = vmatpush.msra.mxu0 %v1359
      %1445 = vmatpush.msra.mxu0 %v1357
      %1446 = vmatpush.msra.mxu0 %v1355
      %1447 = vmatpush.msra.mxu0 %v1353
      %1448 = vmatpush.msra.mxu0 %v1351
      %1449 = vmatpush.msra.mxu0 %v1349
      %1450 = vmatpush.msra.mxu0 %v1347
      %1451 = vmatpush.msra.mxu0 %v1345
      %1452 = vmatmul.f32.gmra.mxu0 %v1339
      %v1453 = vpop.f32.mrf.mxu0
      %v1454 = vadd.f32 %v1422, %v1453
      %1455 = vmatmul.f32.gmra.mxu0 %v1342
      %v1456 = vpop.f32.mrf.mxu0
      %v1457 = vadd.f32 %v1427, %v1456
      %1458 = vdwg.mxu0
      %1459 = vmatpush.msra.mxu0 %v1407
      %1460 = vmatpush.msra.mxu0 %v1405
      %1461 = vmatpush.msra.mxu0 %v1403
      %1462 = vmatpush.msra.mxu0 %v1401
      %1463 = vmatpush.msra.mxu0 %v1399
      %1464 = vmatpush.msra.mxu0 %v1397
      %1465 = vmatpush.msra.mxu0 %v1395
      %1466 = vmatpush.msra.mxu0 %v1393
      %1467 = vmatpush.msra.mxu0 %v1391
      %1468 = vmatpush.msra.mxu0 %v1389
      %1469 = vmatpush.msra.mxu0 %v1387
      %1470 = vmatpush.msra.mxu0 %v1385
      %1471 = vmatpush.msra.mxu0 %v1383
      %1472 = vmatpush.msra.mxu0 %v1381
      %1473 = vmatpush.msra.mxu0 %v1379
      %1474 = vmatpush.msra.mxu0 %v1377
      %1475 = vmatmul.f32.gmra.mxu0 %v1340
      %v1476 = vpop.f32.mrf.mxu0
      %v1477 = vadd.f32 %v1454, %v1476
      %1478 = vmatmul.f32.gmra.mxu0 %v1343
      %v1479 = vpop.f32.mrf.mxu0
      %v1480 = vadd.f32 %v1457, %v1479
      %1481 = vdwg.mxu0
      %1482 = vmatpush.msra.mxu0 0.0
      %1483 = vmatpush.msra.mxu0 0.0
      %1484 = vmatpush.msra.mxu0 0.0
      %1485 = vmatpush.msra.mxu0 0.0
      %1486 = vmatpush.msra.mxu0 0.0
      %1487 = vmatpush.msra.mxu0 0.0
      %1488 = vmatpush.msra.mxu0 0.0
      %1489 = vmatpush.msra.mxu0 0.0
      %1490 = vmatpush.msra.mxu0 0.0
      %1491 = vmatpush.msra.mxu0 0.0
      %1492 = vmatpush.msra.mxu0 0.0
      %1493 = vmatpush.msra.mxu0 0.0
      %1494 = vmatpush.msra.mxu0 %v1415
      %1495 = vmatpush.msra.mxu0 %v1413
      %1496 = vmatpush.msra.mxu0 %v1411
      %1497 = vmatpush.msra.mxu0 %v1409
      %1498 = vmatmul.f32.gmra.mxu0 %v1431
      %v1499 = vpop.f32.mrf.mxu0
      %v1500 = vadd.f32 %v1477, %v1499
      %1501 = vmatmul.f32.gmra.mxu0 %v1434
      %v1502 = vpop.f32.mrf.mxu0
      %v1503 = vadd.f32 %v1480, %v1502
      %1504 = vdwg.mxu0
      %1505 = vmatpush.msra.mxu0 %v1376
      %1506 = vmatpush.msra.mxu0 %v1374
      %1507 = vmatpush.msra.mxu0 %v1372
      %1508 = vmatpush.msra.mxu0 %v1370
      %1509 = vmatpush.msra.mxu0 %v1368
      %1510 = vmatpush.msra.mxu0 %v1366
      %1511 = vmatpush.msra.mxu0 %v1364
      %1512 = vmatpush.msra.mxu0 %v1362
      %1513 = vmatpush.msra.mxu0 %v1360
      %1514 = vmatpush.msra.mxu0 %v1358
      %1515 = vmatpush.msra.mxu0 %v1356
      %1516 = vmatpush.msra.mxu0 %v1354
      %1517 = vmatpush.msra.mxu0 %v1352
      %1518 = vmatpush.msra.mxu0 %v1350
      %1519 = vmatpush.msra.mxu0 %v1348
      %1520 = vmatpush.msra.mxu0 %v1346
      %1521 = vmatmul.f32.gmra.mxu0 %v1339
      %v1522 = vpop.f32.mrf.mxu0
      %v1523 = vadd.f32 %v1422, %v1522
      %1524 = vmatmul.f32.gmra.mxu0 %v1342
      %v1525 = vpop.f32.mrf.mxu0
      %v1526 = vadd.f32 %v1427, %v1525
      %1527 = vdwg.mxu0
      %1528 = vmatpush.msra.mxu0 %v1408
      %1529 = vmatpush.msra.mxu0 %v1406
      %1530 = vmatpush.msra.mxu0 %v1404
      %1531 = vmatpush.msra.mxu0 %v1402
      %1532 = vmatpush.msra.mxu0 %v1400
      %1533 = vmatpush.msra.mxu0 %v1398
      %1534 = vmatpush.msra.mxu0 %v1396
      %1535 = vmatpush.msra.mxu0 %v1394
      %1536 = vmatpush.msra.mxu0 %v1392
      %1537 = vmatpush.msra.mxu0 %v1390
      %1538 = vmatpush.msra.mxu0 %v1388
      %1539 = vmatpush.msra.mxu0 %v1386
      %1540 = vmatpush.msra.mxu0 %v1384
      %1541 = vmatpush.msra.mxu0 %v1382
      %1542 = vmatpush.msra.mxu0 %v1380
      %1543 = vmatpush.msra.mxu0 %v1378
      %1544 = vmatmul.f32.gmra.mxu0 %v1340
      %v1545 = vpop.f32.mrf.mxu0
      %v1546 = vadd.f32 %v1523, %v1545
      %1547 = vmatmul.f32.gmra.mxu0 %v1343
      %v1548 = vpop.f32.mrf.mxu0
      %v1549 = vadd.f32 %v1526, %v1548
      %1550 = vdwg.mxu0
      %1551 = vmatpush.msra.mxu0 0.0
      %1552 = vmatpush.msra.mxu0 0.0
      %1553 = vmatpush.msra.mxu0 0.0
      %1554 = vmatpush.msra.mxu0 0.0
      %1555 = vmatpush.msra.mxu0 0.0
      %1556 = vmatpush.msra.mxu0 0.0
      %1557 = vmatpush.msra.mxu0 0.0
      %1558 = vmatpush.msra.mxu0 0.0
      %1559 = vmatpush.msra.mxu0 0.0
      %1560 = vmatpush.msra.mxu0 0.0
      %1561 = vmatpush.msra.mxu0 0.0
      %1562 = vmatpush.msra.mxu0 0.0
      %1563 = vmatpush.msra.mxu0 %v1416
      %1564 = vmatpush.msra.mxu0 %v1414
      %1565 = vmatpush.msra.mxu0 %v1412
      %1566 = vmatpush.msra.mxu0 %v1410
      %1567 = vmatmul.f32.gmra.mxu0 %v1431
      %v1568 = vpop.f32.mrf.mxu0
      %v1569 = vadd.f32 %v1546, %v1568
      %1570 = vmatmul.f32.gmra.mxu0 %v1434
      %v1571 = vpop.f32.mrf.mxu0
      %v1572 = vadd.f32 %v1549, %v1571
      %1573 = vdwg.mxu0
      %v1574 = vld [vmem:[%s266] sm:$0xff]
      %1576 = vst [vmem:[#allocation1] ss:$2 sm:$0xff] %v1574
      %v1577 = vld.sshfl [vmem:[#allocation1] sm:$0xff pattern:$0x75316420]
      %v1578 = vld.sshfl [vmem:[#allocation1 + $0x8] sm:$0xff pattern:$0x75316420]
      %vm1581 = vcmask 1043456
      %v1582 = vsel %vm1581, %v1577, 0.0
      %v1583 = vsel %vm1581, %v1578, 0.0
      %v1584 = vadd.f32 %v1582, %v1583
      %1585 = vadd.xlane.f32.xlu0 %v1584
      %v1586 = vpop.xlane.xlu0 %1585
      %v1587 = vrcp.pop 256.0
      %v1588 = vmul.f32 256.0, %v1587
      %v1589 = vsub.f32 1.0, %v1588
      %v1590 = vmul.f32 %v1587, %v1589
      %v1591 = vadd.f32 %v1587, %v1590
      %vm1592 = vweird.f32 %v1587
      %v1593 = vsel %vm1592, %v1587, %v1591
      %v1594 = vmul.f32 %v1586, %v1593
      %v1597 = vunpack.c.l.s4 839922192
      %v1598 = vunpack.c.0.s8 %v1597
      %v1599 = vperm.slane %v1594, %v1598
      %v1601 = vsub.f32 %v1574, %v1599
      %v1602 = vmul.f32 %v1601, %v1601
      %1604 = vst [vmem:[#allocation1] ss:$2 sm:$0xff] %v1602
      %v1605 = vld.sshfl [vmem:[#allocation1] sm:$0xff pattern:$0x75316420]
      %v1606 = vld.sshfl [vmem:[#allocation1 + $0x8] sm:$0xff pattern:$0x75316420]
      %v1609 = vsel %vm1581, %v1605, 0.0
      %v1610 = vsel %vm1581, %v1606, 0.0
      %v1611 = vadd.f32 %v1609, %v1610
      %1612 = vadd.xlane.f32.xlu0 %v1611
      %v1613 = vpop.xlane.xlu0 %1612
      %v1614 = vmul.f32 %v1613, %v1593
      %v1615 = vadd.f32 %v1614, 1e-05
      %v1616 = vrsqrt.pop %v1615
      %v1617 = vmul.f32 %v1616, %v1615
      %v1618 = vmul.f32 %v1617, %v1616
      %v1619 = vmul.f32 0.5, %v1618
      %v1620 = vsub.f32 1.5, %v1619
      %v1621 = vmul.f32 %v1616, %v1620
      %vm1622 = vweird.f32 %v1615
      %vm1623 = vweird.f32 %v1616
      %vm1624 = vmor %vm1622, %vm1623
      %v1625 = vsel %vm1624, %v1616, %v1621
      %v1628 = vunpack.c.l.s4 839922192
      %v1629 = vunpack.c.0.s8 %v1628
      %v1630 = vperm.slane %v1625, %v1629
      %v1632 = vmul.f32 %v1601, %v1630
      %v1633 = vadd.f32 %v1500, 1.0
      %v1634 = vadd.f32 %v1569, 1.0
      %v1637 = vrot.slane %v1634, 4
      %v1638 = vsel %vm1581, %v1633, %v1637
      %v1640 = vmul.f32 %v1632, %v1638
      %v1643 = vrot.slane %v1572, 4
      %v1644 = vsel %vm1581, %v1503, %v1643
      %v1646 = vadd.f32 %v1640, %v1644
      %1647 = vst [vmem:[%s271] sm:$0xff] %v1646
      %p1648 = scmp.lt.s32.totalorder %s17, 1
      %s1649 = scalar_select %p1648, %s17, 1
      %s1650 = smul.addr %s1649, 2
      %s1651 = smul.addr %s1650, 4
      %s1652 = scalar_lea.vmem %s6, %s1651
      // Predicated region
      $region45: #{spade_forward.1} parent=43 // pred_check
        %p1653 = pneg %p171
      $region46: #{spade_forward.1} parent=43 // pred_check_branch
        %1655 = sbr.rel (%p1653) target = $region48
      $region47: #{spade_forward.1} parent=43 // pred_region
        _
      $region48: #{spade_forward.1} parent=43 // pred_fallthru
        _
    $region44: #{spade_forward.1} parent=5 // pred_fallthru
      _
    %p1656 = scmp.le.s32.totalorder 2, %s12
    // Predicated region
    $region49: #{spade_forward.1} parent=5 // pred_check
      %p1657 = pneg %p1656
    $region50: #{spade_forward.1} parent=5 // pred_check_branch
      %1659 = sbr.rel (%p1657) target = $region52
    $region51: #{spade_forward.1} parent=5 // pred_region
      %s1660 = ssub.s32 %s12, 2
      // Predicated region
      $region53: #{spade_forward.1} parent=51 // pred_check
        %p1661 = pneg %p177
      $region54: #{spade_forward.1} parent=51 // pred_check_branch
        %1663 = sbr.rel (%p1661) target = $region56
      $region55: #{spade_forward.1} parent=51 // pred_region
        %p1664 = scmp.lt.s32.totalorder %s18, 1
        %s1665 = scalar_select %p1664, %s18, 1
        %s1666 = smul.addr %s1665, 2
        %s1667 = smul.addr %s1666, 4
        %s1668 = scalar_lea.vmem %s6, %s1667
      $region56: #{spade_forward.1} parent=51 // pred_fallthru
        _
    $region52: #{spade_forward.1} parent=5 // pred_fallthru
      _
  $region6: #{spade_forward.1} parent=0 // loop_footer
    %s16 = sadd.s32 1, %s12
  $region7: #{spade_forward.1} parent=0 // loop_footer_branch
    %11 = sbr.rel target = $region3
  $region8: #{spade_forward.1} parent=0 // loop_exit
    _

</llo_original>
